<compile_context>
chip_gen: v7x
topology: tpu7x:2x2x1
jax: 0.10.0
libtpu: 0.0.40
codegen_flags: <defaults>
</compile_context>

<pallas_src>
import math
import functools

import numpy as np
import jax
import jax.numpy as jnp
from jax import lax
from jax.experimental import pallas as pl
from jax.experimental.pallas import tpu as pltpu


def _dac_kernel(qps_ref, kps_ref, qpn_ref, kpn_ref,
                bias_ps_ref, bias_pn_ref,
                a_ps_ref, b_ps_ref, a_pn_ref, b_pn_ref,
                ops_ref, opn_ref, *, heads, e_ps, e_pn, scale_ps, scale_pn):
    """One grid point == one output batch element.

    q*_ref / k*_ref : (1, channel*L, heads*E)   -- PyTorch layout, dims merged
    bias*_ref       : (channel*L, channel*S)    -- 0 on same-channel block, -1e30 off
    a*_ref          : (heads*win, heads*channel*L)  -- head-blockdiag expansion, * 1/channel
    b*_ref          : (channel*S, win)              -- expansion (right side)
    o*_ref          : (1, heads*win, win)
    """

    def branch(q_ref, k_ref, bias_ref, a_ref, b_ref, o_ref, e_dim, scale):
        q = q_ref[0]                     # (C*L, H*E)
        k = k_ref[0]                     # (C*S, H*E)
        bias = bias_ref[...]             # (C*L, C*S)

        probs = []
        for h in range(heads):           # static unroll (tiny H)
            lo = h * e_dim
            qh = q[:, lo:lo + e_dim]     # (C*L, E)
            kh = k[:, lo:lo + e_dim]     # (C*S, E)
            # One MXU pass covers all channels; block-diag bias keeps channels
            # independent through the softmax (off-block entries underflow to 0).
            s = lax.dot_general(qh, kh, (((1,), (1,)), ((), ())),
                                preferred_element_type=jnp.float32)
            s = s * scale + bias
            m = jnp.max(s, axis=-1, keepdims=True)
            e = jnp.exp(s - m)
            denom = jnp.sum(e, axis=-1, keepdims=True)
            probs.append(e * pl.reciprocal(denom, approx=True))

        # (H*C*L, C*S); sublane concat at vreg-aligned boundaries (free placement)
        p_all = probs[0] if heads == 1 else jnp.concatenate(probs, axis=0)

        # Fused repeat/tile expansion + mean-over-channel + head stacking:
        #   out = A_big @ P @ B   with A_big block-diagonal over heads, scaled 1/C.
        tmp = lax.dot_general(a_ref[...], p_all, (((1,), (0,)), ((), ())),
                              preferred_element_type=jnp.float32)   # (H*W, C*S)
        out = lax.dot_general(tmp, b_ref[...], (((1,), (0,)), ((), ())),
                              preferred_element_type=jnp.float32)   # (H*W, W)
        o_ref[0] = out.astype(o_ref.dtype)

    branch(qps_ref, kps_ref, bias_ps_ref, a_ps_ref, b_ps_ref, ops_ref,
           e_ps, scale_ps)
    branch(qpn_ref, kpn_ref, bias_pn_ref, a_pn_ref, b_pn_ref, opn_ref,
           e_pn, scale_pn)


def _block_diag_bias(L, S, C):
    """(C*L, C*S) additive mask: 0 inside same-channel block, -1e30 elsewhere."""
    ri = np.arange(C * L)[:, None] // L
    ci = np.arange(C * S)[None, :] // S
    return np.where(ri == ci, 0.0, -1e30).astype(np.float32)


def _expansion_mats(e_mat, L, S, C, H, W, inv_c):
    """Left (H*W, H*C*L) head-blockdiag (pre-scaled by 1/C) and right (C*S, W)."""
    block = np.tile(e_mat, (1, C)).astype(np.float32) * inv_c      # (W, C*L)
    a_big = np.zeros((H * W, H * C * L), np.float32)
    for h in range(H):
        a_big[h * W:(h + 1) * W, h * C * L:(h + 1) * C * L] = block
    b_mat = np.tile(e_mat.T, (C, 1)).astype(np.float32)            # (C*S, W)
    return a_big, b_mat


def dac_structure_forward(
    queries_patch_size,
    queries_patch_num,
    keys_patch_size,
    keys_patch_num,
    values,          # unused (as in the PyTorch module)
    patch_index,
    attn_mask,       # unused (as in the PyTorch module)
    *,
    win_size,
    patch_size,
    channel,
    scale=None,
    output_attention=True,
):
    del values, attn_mask
    p = int(patch_size[patch_index])
    assert win_size % p == 0

    B, L_ps, H, E_ps = queries_patch_size.shape
    S_ps = keys_patch_size.shape[1]
    B2, L_pn, H2, E_pn = queries_patch_num.shape
    S_pn = keys_patch_num.shape[1]
    assert B == B2 and H == H2 and B % channel == 0
    batch = B // channel
    assert L_ps == S_ps and L_ps * p == win_size, "patch_size branch length mismatch"
    assert L_pn == S_pn and L_pn == p, "patch_num branch length mismatch"

    scale_ps = float(scale) if scale is not None else 1.0 / math.sqrt(E_ps)
    scale_pn = float(scale) if scale is not None else 1.0 / math.sqrt(E_pn)
    inv_c = 1.0 / channel

    # Free row-major merges only (no transpose / extra HBM pass):
    #   (batch*channel, L, H, E) -> (batch, channel*L, H*E)
    qps = queries_patch_size.reshape(batch, channel * L_ps, H * E_ps)
    kps = keys_patch_size.reshape(batch, channel * S_ps, H * E_ps)
    qpn = queries_patch_num.reshape(batch, channel * L_pn, H * E_pn)
    kpn = keys_patch_num.reshape(batch, channel * S_pn, H * E_pn)

    # Constant 0/1 expansion matrices (host-built):
    #   einops.repeat 'b l m n -> b l (m p) (n p)' : out[i, j] = x[i // p, j // p]
    e_rep = (np.arange(win_size)[:, None] // p ==
             np.arange(L_ps)[None, :]).astype(np.float32)           # (W, L_ps)
    #   torch .repeat(1, 1, win//p, win//p)        : out[i, j] = x[i % p, j % p]
    e_tile = (np.arange(win_size)[:, None] % p ==
              np.arange(L_pn)[None, :]).astype(np.float32)          # (W, L_pn)

    a_ps, b_ps = _expansion_mats(e_rep, L_ps, S_ps, channel, H, win_size, inv_c)
    a_pn, b_pn = _expansion_mats(e_tile, L_pn, S_pn, channel, H, win_size, inv_c)
    bias_ps = _block_diag_bias(L_ps, S_ps, channel)
    bias_pn = _block_diag_bias(L_pn, S_pn, channel)

    kernel = functools.partial(
        _dac_kernel, heads=H, e_ps=E_ps, e_pn=E_pn,
        scale_ps=scale_ps, scale_pn=scale_pn)

    out_sds = jax.ShapeDtypeStruct((batch, H * win_size, win_size), jnp.float32)

    const_spec2 = lambda shp: pl.BlockSpec(shp, lambda b: (0, 0))

    series_ps, series_pn = pl.pallas_call(
        kernel,
        out_shape=(out_sds, out_sds),
        grid_spec=pltpu.PrefetchScalarGridSpec(
            num_scalar_prefetch=0,
            grid=(batch,),   # single launch; channels + heads fused in-body
            in_specs=[
                pl.BlockSpec((1, channel * L_ps, H * E_ps), lambda b: (b, 0, 0)),
                pl.BlockSpec((1, channel * S_ps, H * E_ps), lambda b: (b, 0, 0)),
                pl.BlockSpec((1, channel * L_pn, H * E_pn), lambda b: (b, 0, 0)),
                pl.BlockSpec((1, channel * S_pn, H * E_pn), lambda b: (b, 0, 0)),
                const_spec2(bias_ps.shape),
                const_spec2(bias_pn.shape),
                const_spec2(a_ps.shape),
                const_spec2(b_ps.shape),
                const_spec2(a_pn.shape),
                const_spec2(b_pn.shape),
            ],
            out_specs=(
                pl.BlockSpec((1, H * win_size, win_size), lambda b: (b, 0, 0)),
                pl.BlockSpec((1, H * win_size, win_size), lambda b: (b, 0, 0)),
            ),
        ),
        compiler_params=pltpu.CompilerParams(
            dimension_semantics=("parallel",)),
    )(qps, kps, qpn, kpn,
      jnp.asarray(bias_ps), jnp.asarray(bias_pn),
      jnp.asarray(a_ps), jnp.asarray(b_ps),
      jnp.asarray(a_pn), jnp.asarray(b_pn))

    # Free row-major reshape to the module's (batch, H, win, win) layout.
    series_ps = series_ps.reshape(batch, H, win_size, win_size)
    series_pn = series_pn.reshape(batch, H, win_size, win_size)

    if output_attention:
        return series_ps, series_pn
    return None


if __name__ == "__main__":
    # module config
    win_size = 16
    patch_size_list = [2, 4]
    channel = 4
    patch_index = 1
    p = patch_size_list[patch_index]

    # input shapes implied by the forward pass
    batch, H, E = 2, 2, 32
    B = batch * channel            # PyTorch code feeds batch*channel in dim 0
    L_ps = win_size // p           # patch_size-branch sequence length
    L_pn = p                       # patch_num-branch sequence length

    key = jax.random.PRNGKey(0)
    k1, k2, k3, k4, k5 = jax.random.split(key, 5)
    q_ps = jax.random.normal(k1, (B, L_ps, H, E), jnp.float32)
    k_ps = jax.random.normal(k2, (B, L_ps, H, E), jnp.float32)
    q_pn = jax.random.normal(k3, (B, L_pn, H, E), jnp.float32)
    k_pn = jax.random.normal(k4, (B, L_pn, H, E), jnp.float32)
    values = jax.random.normal(k5, (B, L_ps, H, E), jnp.float32)  # unused

    series_ps, series_pn = dac_structure_forward(
        q_ps, q_pn, k_ps, k_pn, values, patch_index, None,
        win_size=win_size, patch_size=patch_size_list, channel=channel,
        output_attention=True,
    )
    jax.block_until_ready((series_ps, series_pn))

    # pure-JAX reference for correctness
    def ref_attn(q, k):
        sc = 1.0 / math.sqrt(q.shape[-1])
        s = jnp.einsum("blhe,bshe->bhls", q, k) * sc
        return jax.nn.softmax(s, axis=-1)

    ref_ps = ref_attn(q_ps, k_ps)
    ref_ps = jnp.repeat(jnp.repeat(ref_ps, p, axis=2), p, axis=3)
    ref_ps = ref_ps.reshape(batch, channel, H, win_size, win_size).mean(axis=1)

    ref_pn = ref_attn(q_pn, k_pn)
    ref_pn = jnp.tile(ref_pn, (1, 1, win_size // p, win_size // p))
    ref_pn = ref_pn.reshape(batch, channel, H, win_size, win_size).mean(axis=1)

    assert series_ps.shape == (batch, H, win_size, win_size)
    assert series_pn.shape == (batch, H, win_size, win_size)
    # tolerance covers pl.reciprocal(approx=True) in the softmax normalization
    assert jnp.allclose(series_ps, ref_ps, atol=2e-3, rtol=2e-3), "patch_size branch mismatch"
    assert jnp.allclose(series_pn, ref_pn, atol=2e-3, rtol=2e-3), "patch_num branch mismatch"

    print("KERNEL_OK")
</pallas_src>

<mosaic_0001>
module attributes {stable_mosaic.version = 11 : i64} {
  func.func @_dac_kernel(%arg0: i32, %arg1: memref<1x16x64xf32, #tpu.memory_space<vmem>>, %arg2: memref<1x16x64xf32, #tpu.memory_space<vmem>>, %arg3: memref<1x16x64xf32, #tpu.memory_space<vmem>>, %arg4: memref<1x16x64xf32, #tpu.memory_space<vmem>>, %arg5: memref<16x16xf32, #tpu.memory_space<vmem>>, %arg6: memref<16x16xf32, #tpu.memory_space<vmem>>, %arg7: memref<32x32xf32, #tpu.memory_space<vmem>>, %arg8: memref<16x16xf32, #tpu.memory_space<vmem>>, %arg9: memref<32x32xf32, #tpu.memory_space<vmem>>, %arg10: memref<16x16xf32, #tpu.memory_space<vmem>>, %arg11: memref<1x32x16xf32, #tpu.memory_space<vmem>>, %arg12: memref<1x32x16xf32, #tpu.memory_space<vmem>>) attributes {dimension_semantics = [#tpu.dimension_semantics<parallel>], iteration_bounds = array<i64: 2>, scalar_prefetch = 0 : i64, scratch_operands = 0 : i64, tpu.core_type = #tpu.core_type<tc>, window_params = [{transform_indices = @transform_0, window_bounds = array<i64: 1, 16, 64>}, {transform_indices = @transform_1, window_bounds = array<i64: 1, 16, 64>}, {transform_indices = @transform_2, window_bounds = array<i64: 1, 16, 64>}, {transform_indices = @transform_3, window_bounds = array<i64: 1, 16, 64>}, {pipeline_mode = #tpu.pipeline_mode<synchronous>, transform_indices = @transform_4, window_bounds = array<i64: 16, 16>}, {pipeline_mode = #tpu.pipeline_mode<synchronous>, transform_indices = @transform_5, window_bounds = array<i64: 16, 16>}, {pipeline_mode = #tpu.pipeline_mode<synchronous>, transform_indices = @transform_6, window_bounds = array<i64: 32, 32>}, {pipeline_mode = #tpu.pipeline_mode<synchronous>, transform_indices = @transform_7, window_bounds = array<i64: 16, 16>}, {pipeline_mode = #tpu.pipeline_mode<synchronous>, transform_indices = @transform_8, window_bounds = array<i64: 32, 32>}, {pipeline_mode = #tpu.pipeline_mode<synchronous>, transform_indices = @transform_9, window_bounds = array<i64: 16, 16>}, {transform_indices = @transform_10, window_bounds = array<i64: 1, 32, 16>}, {transform_indices = @transform_11, window_bounds = array<i64: 1, 32, 16>}]} {
    %c0 = arith.constant 0 : index
    %c0_0 = arith.constant 0 : index
    %c0_1 = arith.constant 0 : index
    %0 = vector.load %arg1[%c0, %c0_0, %c0_1] : memref<1x16x64xf32, #tpu.memory_space<vmem>>, vector<1x16x64xf32>
    %1 = vector.shape_cast %0 : vector<1x16x64xf32> to vector<16x64xf32>
    %c0_2 = arith.constant 0 : index
    %c0_3 = arith.constant 0 : index
    %c0_4 = arith.constant 0 : index
    %2 = vector.load %arg2[%c0_2, %c0_3, %c0_4] : memref<1x16x64xf32, #tpu.memory_space<vmem>>, vector<1x16x64xf32>
    %3 = vector.shape_cast %2 : vector<1x16x64xf32> to vector<16x64xf32>
    %c0_5 = arith.constant 0 : index
    %c0_6 = arith.constant 0 : index
    %4 = vector.load %arg5[%c0_5, %c0_6] : memref<16x16xf32, #tpu.memory_space<vmem>>, vector<16x16xf32>
    %5 = vector.extract_strided_slice %1 {offsets = [0, 0], sizes = [16, 32], strides = [1, 1]} : vector<16x64xf32> to vector<16x32xf32>
    %6 = vector.extract_strided_slice %3 {offsets = [0, 0], sizes = [16, 32], strides = [1, 1]} : vector<16x64xf32> to vector<16x32xf32>
    %cst = arith.constant dense<0.000000e+00> : vector<16x16xf32>
    %7 = tpu.matmul %5, %6, %cst {dimension_numbers = #tpu.dot_dimension_numbers<[1], [1], [0], [0], [0, 0, 1, 0], [], []>} : vector<16x32xf32>, vector<16x32xf32>, vector<16x16xf32> -> vector<16x16xf32>
    %cst_7 = arith.constant 0.176776692 : f32
    %8 = vector.broadcast %cst_7 : f32 to vector<16x16xf32>
    %9 = arith.mulf %7, %8 : vector<16x16xf32>
    %10 = arith.addf %9, %4 : vector<16x16xf32>
    %cst_8 = arith.constant dense<0xFF800000> : vector<16xf32>
    %11 = vector.multi_reduction <maximumf>, %10, %cst_8 [1] : vector<16x16xf32> to vector<16xf32>
    %12 = vector.shape_cast %11 : vector<16xf32> to vector<16x1xf32>
    %13 = vector.broadcast %12 : vector<16x1xf32> to vector<16x16xf32>
    %14 = arith.subf %10, %13 : vector<16x16xf32>
    %15 = math.exp %14 : vector<16x16xf32>
    %cst_9 = arith.constant dense<0.000000e+00> : vector<16xf32>
    %16 = vector.multi_reduction <add>, %15, %cst_9 [1] : vector<16x16xf32> to vector<16xf32>
    %17 = vector.shape_cast %16 : vector<16xf32> to vector<16x1xf32>
    %18 = tpu.reciprocal %17 {approx = true} : vector<16x1xf32> -> vector<16x1xf32>
    %19 = vector.broadcast %18 : vector<16x1xf32> to vector<16x16xf32>
    %20 = arith.mulf %15, %19 : vector<16x16xf32>
    %21 = vector.extract_strided_slice %1 {offsets = [0, 32], sizes = [16, 32], strides = [1, 1]} : vector<16x64xf32> to vector<16x32xf32>
    %22 = vector.extract_strided_slice %3 {offsets = [0, 32], sizes = [16, 32], strides = [1, 1]} : vector<16x64xf32> to vector<16x32xf32>
    %cst_10 = arith.constant dense<0.000000e+00> : vector<16x16xf32>
    %23 = tpu.matmul %21, %22, %cst_10 {dimension_numbers = #tpu.dot_dimension_numbers<[1], [1], [0], [0], [0, 0, 1, 0], [], []>} : vector<16x32xf32>, vector<16x32xf32>, vector<16x16xf32> -> vector<16x16xf32>
    %cst_11 = arith.constant 0.176776692 : f32
    %24 = vector.broadcast %cst_11 : f32 to vector<16x16xf32>
    %25 = arith.mulf %23, %24 : vector<16x16xf32>
    %26 = arith.addf %25, %4 : vector<16x16xf32>
    %cst_12 = arith.constant dense<0xFF800000> : vector<16xf32>
    %27 = vector.multi_reduction <maximumf>, %26, %cst_12 [1] : vector<16x16xf32> to vector<16xf32>
    %28 = vector.shape_cast %27 : vector<16xf32> to vector<16x1xf32>
    %29 = vector.broadcast %28 : vector<16x1xf32> to vector<16x16xf32>
    %30 = arith.subf %26, %29 : vector<16x16xf32>
    %31 = math.exp %30 : vector<16x16xf32>
    %cst_13 = arith.constant dense<0.000000e+00> : vector<16xf32>
    %32 = vector.multi_reduction <add>, %31, %cst_13 [1] : vector<16x16xf32> to vector<16xf32>
    %33 = vector.shape_cast %32 : vector<16xf32> to vector<16x1xf32>
    %34 = tpu.reciprocal %33 {approx = true} : vector<16x1xf32> -> vector<16x1xf32>
    %35 = vector.broadcast %34 : vector<16x1xf32> to vector<16x16xf32>
    %36 = arith.mulf %31, %35 : vector<16x16xf32>
    %37 = tpu.concatenate %20, %36 in 0 : vector<16x16xf32>, vector<16x16xf32> -> vector<32x16xf32>
    %c0_14 = arith.constant 0 : index
    %c0_15 = arith.constant 0 : index
    %38 = vector.load %arg7[%c0_14, %c0_15] : memref<32x32xf32, #tpu.memory_space<vmem>>, vector<32x32xf32>
    %cst_16 = arith.constant dense<0.000000e+00> : vector<32x16xf32>
    %39 = tpu.matmul %38, %37, %cst_16 {dimension_numbers = #tpu.dot_dimension_numbers<[1], [0], [0], [1], [0, 0, 1, 1], [], []>} : vector<32x32xf32>, vector<32x16xf32>, vector<32x16xf32> -> vector<32x16xf32>
    %c0_17 = arith.constant 0 : index
    %c0_18 = arith.constant 0 : index
    %40 = vector.load %arg8[%c0_17, %c0_18] : memref<16x16xf32, #tpu.memory_space<vmem>>, vector<16x16xf32>
    %cst_19 = arith.constant dense<0.000000e+00> : vector<32x16xf32>
    %41 = tpu.matmul %39, %40, %cst_19 {dimension_numbers = #tpu.dot_dimension_numbers<[1], [0], [0], [1], [0, 0, 1, 1], [], []>} : vector<32x16xf32>, vector<16x16xf32>, vector<32x16xf32> -> vector<32x16xf32>
    %c0_20 = arith.constant 0 : index
    %c0_21 = arith.constant 0 : index
    %c0_22 = arith.constant 0 : index
    %42 = vector.load %arg11[%c0_20, %c0_21, %c0_22] : memref<1x32x16xf32, #tpu.memory_space<vmem>>, vector<1x32x16xf32>
    %43 = vector.shape_cast %42 : vector<1x32x16xf32> to vector<32x16xf32>
    %44 = vector.shape_cast %41 : vector<32x16xf32> to vector<1x32x16xf32>
    tpu.vector_store %arg11[%c0_20, %c0_21, %c0_22], %44 {strides = array<i32>} : memref<1x32x16xf32, #tpu.memory_space<vmem>>, vector<1x32x16xf32>,
    %c0_23 = arith.constant 0 : index
    %c0_24 = arith.constant 0 : index
    %c0_25 = arith.constant 0 : index
    %45 = vector.load %arg3[%c0_23, %c0_24, %c0_25] : memref<1x16x64xf32, #tpu.memory_space<vmem>>, vector<1x16x64xf32>
    %46 = vector.shape_cast %45 : vector<1x16x64xf32> to vector<16x64xf32>
    %c0_26 = arith.constant 0 : index
    %c0_27 = arith.constant 0 : index
    %c0_28 = arith.constant 0 : index
    %47 = vector.load %arg4[%c0_26, %c0_27, %c0_28] : memref<1x16x64xf32, #tpu.memory_space<vmem>>, vector<1x16x64xf32>
    %48 = vector.shape_cast %47 : vector<1x16x64xf32> to vector<16x64xf32>
    %c0_29 = arith.constant 0 : index
    %c0_30 = arith.constant 0 : index
    %49 = vector.load %arg6[%c0_29, %c0_30] : memref<16x16xf32, #tpu.memory_space<vmem>>, vector<16x16xf32>
    %50 = vector.extract_strided_slice %46 {offsets = [0, 0], sizes = [16, 32], strides = [1, 1]} : vector<16x64xf32> to vector<16x32xf32>
    %51 = vector.extract_strided_slice %48 {offsets = [0, 0], sizes = [16, 32], strides = [1, 1]} : vector<16x64xf32> to vector<16x32xf32>
    %cst_31 = arith.constant dense<0.000000e+00> : vector<16x16xf32>
    %52 = tpu.matmul %50, %51, %cst_31 {dimension_numbers = #tpu.dot_dimension_numbers<[1], [1], [0], [0], [0, 0, 1, 0], [], []>} : vector<16x32xf32>, vector<16x32xf32>, vector<16x16xf32> -> vector<16x16xf32>
    %cst_32 = arith.constant 0.176776692 : f32
    %53 = vector.broadcast %cst_32 : f32 to vector<16x16xf32>
    %54 = arith.mulf %52, %53 : vector<16x16xf32>
    %55 = arith.addf %54, %49 : vector<16x16xf32>
    %cst_33 = arith.constant dense<0xFF800000> : vector<16xf32>
    %56 = vector.multi_reduction <maximumf>, %55, %cst_33 [1] : vector<16x16xf32> to vector<16xf32>
    %57 = vector.shape_cast %56 : vector<16xf32> to vector<16x1xf32>
    %58 = vector.broadcast %57 : vector<16x1xf32> to vector<16x16xf32>
    %59 = arith.subf %55, %58 : vector<16x16xf32>
    %60 = math.exp %59 : vector<16x16xf32>
    %cst_34 = arith.constant dense<0.000000e+00> : vector<16xf32>
    %61 = vector.multi_reduction <add>, %60, %cst_34 [1] : vector<16x16xf32> to vector<16xf32>
    %62 = vector.shape_cast %61 : vector<16xf32> to vector<16x1xf32>
    %63 = tpu.reciprocal %62 {approx = true} : vector<16x1xf32> -> vector<16x1xf32>
    %64 = vector.broadcast %63 : vector<16x1xf32> to vector<16x16xf32>
    %65 = arith.mulf %60, %64 : vector<16x16xf32>
    %66 = vector.extract_strided_slice %46 {offsets = [0, 32], sizes = [16, 32], strides = [1, 1]} : vector<16x64xf32> to vector<16x32xf32>
    %67 = vector.extract_strided_slice %48 {offsets = [0, 32], sizes = [16, 32], strides = [1, 1]} : vector<16x64xf32> to vector<16x32xf32>
    %cst_35 = arith.constant dense<0.000000e+00> : vector<16x16xf32>
    %68 = tpu.matmul %66, %67, %cst_35 {dimension_numbers = #tpu.dot_dimension_numbers<[1], [1], [0], [0], [0, 0, 1, 0], [], []>} : vector<16x32xf32>, vector<16x32xf32>, vector<16x16xf32> -> vector<16x16xf32>
    %cst_36 = arith.constant 0.176776692 : f32
    %69 = vector.broadcast %cst_36 : f32 to vector<16x16xf32>
    %70 = arith.mulf %68, %69 : vector<16x16xf32>
    %71 = arith.addf %70, %49 : vector<16x16xf32>
    %cst_37 = arith.constant dense<0xFF800000> : vector<16xf32>
    %72 = vector.multi_reduction <maximumf>, %71, %cst_37 [1] : vector<16x16xf32> to vector<16xf32>
    %73 = vector.shape_cast %72 : vector<16xf32> to vector<16x1xf32>
    %74 = vector.broadcast %73 : vector<16x1xf32> to vector<16x16xf32>
    %75 = arith.subf %71, %74 : vector<16x16xf32>
    %76 = math.exp %75 : vector<16x16xf32>
    %cst_38 = arith.constant dense<0.000000e+00> : vector<16xf32>
    %77 = vector.multi_reduction <add>, %76, %cst_38 [1] : vector<16x16xf32> to vector<16xf32>
    %78 = vector.shape_cast %77 : vector<16xf32> to vector<16x1xf32>
    %79 = tpu.reciprocal %78 {approx = true} : vector<16x1xf32> -> vector<16x1xf32>
    %80 = vector.broadcast %79 : vector<16x1xf32> to vector<16x16xf32>
    %81 = arith.mulf %76, %80 : vector<16x16xf32>
    %82 = tpu.concatenate %65, %81 in 0 : vector<16x16xf32>, vector<16x16xf32> -> vector<32x16xf32>
    %c0_39 = arith.constant 0 : index
    %c0_40 = arith.constant 0 : index
    %83 = vector.load %arg9[%c0_39, %c0_40] : memref<32x32xf32, #tpu.memory_space<vmem>>, vector<32x32xf32>
    %cst_41 = arith.constant dense<0.000000e+00> : vector<32x16xf32>
    %84 = tpu.matmul %83, %82, %cst_41 {dimension_numbers = #tpu.dot_dimension_numbers<[1], [0], [0], [1], [0, 0, 1, 1], [], []>} : vector<32x32xf32>, vector<32x16xf32>, vector<32x16xf32> -> vector<32x16xf32>
    %c0_42 = arith.constant 0 : index
    %c0_43 = arith.constant 0 : index
    %85 = vector.load %arg10[%c0_42, %c0_43] : memref<16x16xf32, #tpu.memory_space<vmem>>, vector<16x16xf32>
    %cst_44 = arith.constant dense<0.000000e+00> : vector<32x16xf32>
    %86 = tpu.matmul %84, %85, %cst_44 {dimension_numbers = #tpu.dot_dimension_numbers<[1], [0], [0], [1], [0, 0, 1, 1], [], []>} : vector<32x16xf32>, vector<16x16xf32>, vector<32x16xf32> -> vector<32x16xf32>
    %c0_45 = arith.constant 0 : index
    %c0_46 = arith.constant 0 : index
    %c0_47 = arith.constant 0 : index
    %87 = vector.load %arg12[%c0_45, %c0_46, %c0_47] : memref<1x32x16xf32, #tpu.memory_space<vmem>>, vector<1x32x16xf32>
    %88 = vector.shape_cast %87 : vector<1x32x16xf32> to vector<32x16xf32>
    %89 = vector.shape_cast %86 : vector<32x16xf32> to vector<1x32x16xf32>
    tpu.vector_store %arg12[%c0_45, %c0_46, %c0_47], %89 {strides = array<i32>} : memref<1x32x16xf32, #tpu.memory_space<vmem>>, vector<1x32x16xf32>,
    return
  }
  func.func @transform_0(%arg0: i32) -> (i32, i32, i32) {
    %c0_i32 = arith.constant 0 : i32
    %c0_i32_0 = arith.constant 0 : i32
    %c0_i32_1 = arith.constant 0 : i32
    return %arg0, %c0_i32, %c0_i32_0 : i32, i32, i32
  }
  func.func @transform_1(%arg0: i32) -> (i32, i32, i32) {
    %c0_i32 = arith.constant 0 : i32
    %c0_i32_0 = arith.constant 0 : i32
    %c0_i32_1 = arith.constant 0 : i32
    return %arg0, %c0_i32, %c0_i32_0 : i32, i32, i32
  }
  func.func @transform_2(%arg0: i32) -> (i32, i32, i32) {
    %c0_i32 = arith.constant 0 : i32
    %c0_i32_0 = arith.constant 0 : i32
    %c0_i32_1 = arith.constant 0 : i32
    return %arg0, %c0_i32, %c0_i32_0 : i32, i32, i32
  }
  func.func @transform_3(%arg0: i32) -> (i32, i32, i32) {
    %c0_i32 = arith.constant 0 : i32
    %c0_i32_0 = arith.constant 0 : i32
    %c0_i32_1 = arith.constant 0 : i32
    return %arg0, %c0_i32, %c0_i32_0 : i32, i32, i32
  }
  func.func @transform_4(%arg0: i32) -> (i32, i32) {
    %c0_i32 = arith.constant 0 : i32
    %c0_i32_0 = arith.constant 0 : i32
    %c0_i32_1 = arith.constant 0 : i32
    return %c0_i32, %c0_i32_0 : i32, i32
  }
  func.func @transform_5(%arg0: i32) -> (i32, i32) {
    %c0_i32 = arith.constant 0 : i32
    %c0_i32_0 = arith.constant 0 : i32
    %c0_i32_1 = arith.constant 0 : i32
    return %c0_i32, %c0_i32_0 : i32, i32
  }
  func.func @transform_6(%arg0: i32) -> (i32, i32) {
    %c0_i32 = arith.constant 0 : i32
    %c0_i32_0 = arith.constant 0 : i32
    %c0_i32_1 = arith.constant 0 : i32
    return %c0_i32, %c0_i32_0 : i32, i32
  }
  func.func @transform_7(%arg0: i32) -> (i32, i32) {
    %c0_i32 = arith.constant 0 : i32
    %c0_i32_0 = arith.constant 0 : i32
    %c0_i32_1 = arith.constant 0 : i32
    return %c0_i32, %c0_i32_0 : i32, i32
  }
  func.func @transform_8(%arg0: i32) -> (i32, i32) {
    %c0_i32 = arith.constant 0 : i32
    %c0_i32_0 = arith.constant 0 : i32
    %c0_i32_1 = arith.constant 0 : i32
    return %c0_i32, %c0_i32_0 : i32, i32
  }
  func.func @transform_9(%arg0: i32) -> (i32, i32) {
    %c0_i32 = arith.constant 0 : i32
    %c0_i32_0 = arith.constant 0 : i32
    %c0_i32_1 = arith.constant 0 : i32
    return %c0_i32, %c0_i32_0 : i32, i32
  }
  func.func @transform_10(%arg0: i32) -> (i32, i32, i32) {
    %c0_i32 = arith.constant 0 : i32
    %c0_i32_0 = arith.constant 0 : i32
    %c0_i32_1 = arith.constant 0 : i32
    return %arg0, %c0_i32, %c0_i32_0 : i32, i32, i32
  }
  func.func @transform_11(%arg0: i32) -> (i32, i32, i32) {
    %c0_i32 = arith.constant 0 : i32
    %c0_i32_0 = arith.constant 0 : i32
    %c0_i32_1 = arith.constant 0 : i32
    return %arg0, %c0_i32, %c0_i32_0 : i32, i32, i32
  }
}

</mosaic_0001>

<llo_original>
// kernel: tpu_custom_call.1
$region0: #{tpu_custom_call.1}
  #allocation0 [shape = 'u32[]', space=smem, size = 0x4, offset = 0x4, fixed_abs, tag = 'smem constant byte address 0x4 - core index']
  #allocation1 [shape = 'u32[144,128]{1,0:T(1,128)}', space=vmem, size = 0x12000, scoped, tag = 'internal scratch']
  %s0 = inlined_call_operand.hbm [shape: f32[2,16,64], index: 0, kind: input, shape index: {}]
  %s1 = inlined_call_operand.hbm [shape: f32[2,16,64], index: 1, kind: input, shape index: {}]
  %s2 = inlined_call_operand.hbm [shape: f32[2,16,64], index: 2, kind: input, shape index: {}]
  %s3 = inlined_call_operand.hbm [shape: f32[2,16,64], index: 3, kind: input, shape index: {}]
  %s4 = inlined_call_operand.hbm [shape: f32[16,16], index: 4, kind: input, shape index: {}]
  %s5 = inlined_call_operand.vmem [shape: f32[16,16], index: 5, kind: input, shape index: {}]
  %s6 = inlined_call_operand.hbm [shape: f32[32,32], index: 6, kind: input, shape index: {}]
  %s7 = inlined_call_operand.hbm [shape: f32[16,16], index: 7, kind: input, shape index: {}]
  %s8 = inlined_call_operand.hbm [shape: f32[32,32], index: 8, kind: input, shape index: {}]
  %s9 = inlined_call_operand.vmem [shape: f32[16,16], index: 9, kind: input, shape index: {}]
  %s10 = inlined_call_operand.vmem [shape: f32[2,32,16], index: 10, kind: output, shape index: {0}]
  %s11 = inlined_call_operand.vmem [shape: f32[2,32,16], index: 11, kind: output, shape index: {1}]
  %12 = xla_tuple %s10, %s11
  %s13 = sld [smem:[#allocation0]]
  $region113: #{tpu_custom_call.1} parent=0
    _
  %s15 = ssub.s32 1, %s13
  %s16 = scalar_select 0, %s15, %s13
  $region1: #{tpu_custom_call.1} parent=0
    #allocation2 [shape = 'u8[16384]{0}', space=vmem, size = 0x4000, scoped, tag = 'input window, operand 0']
    #allocation3 [shape = 's32[2]{0}', space=sflag, size = 0x8, scoped, tag = 'scoped memory for tpu_custom_call.1']
    #allocation4 [shape = 'u8[16384]{0}', space=vmem, size = 0x4000, scoped, tag = 'input window, operand 1']
    #allocation5 [shape = 's32[2]{0}', space=sflag, size = 0x8, scoped, tag = 'scoped memory for tpu_custom_call.1']
    #allocation6 [shape = 'u8[16384]{0}', space=vmem, size = 0x4000, scoped, tag = 'input window, operand 2']
    #allocation7 [shape = 'u8[16384]{0}', space=vmem, size = 0x4000, scoped, tag = 'input window, operand 3']
    #allocation8 [shape = 's32[2]{0}', space=sflag, size = 0x8, scoped, tag = 'scoped memory for tpu_custom_call.1']
    #allocation9 [shape = 'u8[8192]{0}', space=vmem, size = 0x2000, scoped, tag = 'input window, operand 4, single buffered']
    #allocation10 [shape = 'u8[16384]{0}', space=vmem, size = 0x4000, scoped, tag = 'input window, operand 6, single buffered']
    #allocation11 [shape = 's32[1]{0}', space=sflag, size = 0x4, scoped, tag = 'scoped memory for tpu_custom_call.1']
    #allocation12 [shape = 'u8[8192]{0}', space=vmem, size = 0x2000, scoped, tag = 'input window, operand 7, single buffered']
    #allocation13 [shape = 'u8[16384]{0}', space=vmem, size = 0x4000, scoped, tag = 'input window, operand 8, single buffered']
    #allocation14 [shape = 's32[1]{0}', space=sflag, size = 0x4, scoped, tag = 'scoped memory for tpu_custom_call.1']
    %17 = vsyncpa [#allocation3], 0
    %s18 = scalar_lea.sflag [#allocation3], 1
    %19 = vsyncpa %s18, 0
    %20 = vsyncpa [#allocation5], 0
    %s21 = scalar_lea.sflag [#allocation5], 1
    %22 = vsyncpa %s21, 0
    %23 = vsyncpa [#allocation8], 0
    %s24 = scalar_lea.sflag [#allocation8], 1
    %25 = vsyncpa %s24, 0
    %26 = vsyncpa [#allocation11], 0
    %27 = vsyncpa [#allocation14], 0
    loop: start=0, step=1, limit=4
    $region2: #{tpu_custom_call.1} parent=1 // loop_pre_header
      _
    $region3: #{tpu_custom_call.1} parent=1 // loop_header
      %s29 = sphi 0, %s33
      %p30 = scmp.ge.s32.totalorder %s29, 4
      %s39 = sphi 0, %s41
      %s42 = sphi 0, %s39
      %s43 = sphi 0, %s42
      %s59 = sphi 0, %s43
      %s65 = sphi 0, %s67
      %s68 = sphi 0, %s65
      %s69 = sphi 0, %s68
      %s85 = sphi 0, %s69
      %s91 = sphi 0, %s93
      %s94 = sphi 0, %s91
      %s95 = sphi 0, %s94
      %s111 = sphi 0, %s95
      %s117 = sphi 0, %s119
      %s120 = sphi 0, %s117
      %s121 = sphi 0, %s120
      %s137 = sphi 0, %s121
      %s141 = sphi 0, %s141
      %s143 = sphi 0, %s141
      %s144 = sphi 0, %s143
      %s158 = sphi 0, %s144
      %s162 = sphi 0, %s162
      %s164 = sphi 0, %s162
      %s165 = sphi 0, %s164
      %s179 = sphi 0, %s165
      %s183 = sphi 0, %s183
      %s185 = sphi 0, %s183
      %s186 = sphi 0, %s185
      %s200 = sphi 0, %s186
      %s204 = sphi 0, %s204
      %s206 = sphi 0, %s204
      %s207 = sphi 0, %s206
      %s221 = sphi 0, %s207
      %s225 = sphi 0, %s225
      %s227 = sphi 0, %s225
      %s228 = sphi 0, %s227
      %s242 = sphi 0, %s228
      %s246 = sphi 0, %s246
      %s248 = sphi 0, %s246
      %s249 = sphi 0, %s248
      %s263 = sphi 0, %s249
      %s269 = sphi 0, %s271
      %s272 = sphi 0, %s269
      %s273 = sphi 0, %s272
      %s289 = sphi 0, %s273
      %s295 = sphi 0, %s297
      %s298 = sphi 0, %s295
      %s299 = sphi 0, %s298
      %s315 = sphi 0, %s299
    $region4: #{tpu_custom_call.1} parent=1 // loop_header_branch
      %32 = sbr.rel (%p30) target = $region8
    $region5: #{tpu_custom_call.1} parent=1 // loop_body
      %s34 = ssub.s32 %s29, 1
      %s35 = ssub.s32 %s29, 2
      %s36 = sadd.s32 %s29, 1
      %s37 = ssub.s32 %s29, %s36
      %p38 = scmp.eq.s32.totalorder %s37, 0
      %s40 = sadd.s32 %s39, 1
      %s41 = scalar_select %p38, %s39, %s40
      %p44 = pneg %p38
      %p45 = scmp.eq.s32.totalorder %s29, 1
      %p46 = por %p44, %p45
      %p47 = scmp.ne.s32.totalorder %s39, %s42
      %p48 = scmp.eq.s32.totalorder %s29, 0
      %p49 = por %p47, %p48
      %p50 = scmp.ne.s32.totalorder %s39, %s42
      %p51 = scmp.eq.s32.totalorder %s34, 1
      %p52 = por %p50, %p51
      %p53 = scmp.ne.s32.totalorder %s42, %s43
      %p54 = scmp.eq.s32.totalorder %s34, 0
      %p55 = por %p53, %p54
      %p56 = scmp.ne.s32.totalorder %s42, %s43
      %p57 = scmp.eq.s32.totalorder %s35, 1
      %p58 = por %p56, %p57
      %p60 = scmp.ne.s32.totalorder %s43, %s59
      %p61 = scmp.eq.s32.totalorder %s35, 0
      %p62 = por %p60, %p61
      %s63 = ssub.s32 %s29, %s36
      %p64 = scmp.eq.s32.totalorder %s63, 0
      %s66 = sadd.s32 %s65, 1
      %s67 = scalar_select %p64, %s65, %s66
      %p70 = pneg %p64
      %p71 = scmp.eq.s32.totalorder %s29, 1
      %p72 = por %p70, %p71
      %p73 = scmp.ne.s32.totalorder %s65, %s68
      %p74 = scmp.eq.s32.totalorder %s29, 0
      %p75 = por %p73, %p74
      %p76 = scmp.ne.s32.totalorder %s65, %s68
      %p77 = scmp.eq.s32.totalorder %s34, 1
      %p78 = por %p76, %p77
      %p79 = scmp.ne.s32.totalorder %s68, %s69
      %p80 = scmp.eq.s32.totalorder %s34, 0
      %p81 = por %p79, %p80
      %p82 = scmp.ne.s32.totalorder %s68, %s69
      %p83 = scmp.eq.s32.totalorder %s35, 1
      %p84 = por %p82, %p83
      %p86 = scmp.ne.s32.totalorder %s69, %s85
      %p87 = scmp.eq.s32.totalorder %s35, 0
      %p88 = por %p86, %p87
      %s89 = ssub.s32 %s29, %s36
      %p90 = scmp.eq.s32.totalorder %s89, 0
      %s92 = sadd.s32 %s91, 1
      %s93 = scalar_select %p90, %s91, %s92
      %p96 = pneg %p90
      %p97 = scmp.eq.s32.totalorder %s29, 1
      %p98 = por %p96, %p97
      %p99 = scmp.ne.s32.totalorder %s91, %s94
      %p100 = scmp.eq.s32.totalorder %s29, 0
      %p101 = por %p99, %p100
      %p102 = scmp.ne.s32.totalorder %s91, %s94
      %p103 = scmp.eq.s32.totalorder %s34, 1
      %p104 = por %p102, %p103
      %p105 = scmp.ne.s32.totalorder %s94, %s95
      %p106 = scmp.eq.s32.totalorder %s34, 0
      %p107 = por %p105, %p106
      %p108 = scmp.ne.s32.totalorder %s94, %s95
      %p109 = scmp.eq.s32.totalorder %s35, 1
      %p110 = por %p108, %p109
      %p112 = scmp.ne.s32.totalorder %s95, %s111
      %p113 = scmp.eq.s32.totalorder %s35, 0
      %p114 = por %p112, %p113
      %s115 = ssub.s32 %s29, %s36
      %p116 = scmp.eq.s32.totalorder %s115, 0
      %s118 = sadd.s32 %s117, 1
      %s119 = scalar_select %p116, %s117, %s118
      %p122 = pneg %p116
      %p123 = scmp.eq.s32.totalorder %s29, 1
      %p124 = por %p122, %p123
      %p125 = scmp.ne.s32.totalorder %s117, %s120
      %p126 = scmp.eq.s32.totalorder %s29, 0
      %p127 = por %p125, %p126
      %p128 = scmp.ne.s32.totalorder %s117, %s120
      %p129 = scmp.eq.s32.totalorder %s34, 1
      %p130 = por %p128, %p129
      %p131 = scmp.ne.s32.totalorder %s120, %s121
      %p132 = scmp.eq.s32.totalorder %s34, 0
      %p133 = por %p131, %p132
      %p134 = scmp.ne.s32.totalorder %s120, %s121
      %p135 = scmp.eq.s32.totalorder %s35, 1
      %p136 = por %p134, %p135
      %p138 = scmp.ne.s32.totalorder %s121, %s137
      %p139 = scmp.eq.s32.totalorder %s35, 0
      %p140 = por %p138, %p139
      %s142 = sadd.s32 %s141, 1
      %p145 = scmp.eq.s32.totalorder %s29, 1
      %p146 = scmp.ne.s32.totalorder %s141, %s143
      %p147 = scmp.eq.s32.totalorder %s29, 0
      %p148 = por %p146, %p147
      %p149 = scmp.ne.s32.totalorder %s141, %s143
      %p150 = scmp.eq.s32.totalorder %s34, 1
      %p151 = por %p149, %p150
      %p152 = scmp.ne.s32.totalorder %s143, %s144
      %p153 = scmp.eq.s32.totalorder %s34, 0
      %p154 = por %p152, %p153
      %p155 = scmp.ne.s32.totalorder %s143, %s144
      %p156 = scmp.eq.s32.totalorder %s35, 1
      %p157 = por %p155, %p156
      %p159 = scmp.ne.s32.totalorder %s144, %s158
      %p160 = scmp.eq.s32.totalorder %s35, 0
      %p161 = por %p159, %p160
      %s163 = sadd.s32 %s162, 1
      %p166 = scmp.eq.s32.totalorder %s29, 1
      %p167 = scmp.ne.s32.totalorder %s162, %s164
      %p168 = scmp.eq.s32.totalorder %s29, 0
      %p169 = por %p167, %p168
      %p170 = scmp.ne.s32.totalorder %s162, %s164
      %p171 = scmp.eq.s32.totalorder %s34, 1
      %p172 = por %p170, %p171
      %p173 = scmp.ne.s32.totalorder %s164, %s165
      %p174 = scmp.eq.s32.totalorder %s34, 0
      %p175 = por %p173, %p174
      %p176 = scmp.ne.s32.totalorder %s164, %s165
      %p177 = scmp.eq.s32.totalorder %s35, 1
      %p178 = por %p176, %p177
      %p180 = scmp.ne.s32.totalorder %s165, %s179
      %p181 = scmp.eq.s32.totalorder %s35, 0
      %p182 = por %p180, %p181
      %s184 = sadd.s32 %s183, 1
      %p187 = scmp.eq.s32.totalorder %s29, 1
      %p188 = scmp.ne.s32.totalorder %s183, %s185
      %p189 = scmp.eq.s32.totalorder %s29, 0
      %p190 = por %p188, %p189
      %p191 = scmp.ne.s32.totalorder %s183, %s185
      %p192 = scmp.eq.s32.totalorder %s34, 1
      %p193 = por %p191, %p192
      %p194 = scmp.ne.s32.totalorder %s185, %s186
      %p195 = scmp.eq.s32.totalorder %s34, 0
      %p196 = por %p194, %p195
      %p197 = scmp.ne.s32.totalorder %s185, %s186
      %p198 = scmp.eq.s32.totalorder %s35, 1
      %p199 = por %p197, %p198
      %p201 = scmp.ne.s32.totalorder %s186, %s200
      %p202 = scmp.eq.s32.totalorder %s35, 0
      %p203 = por %p201, %p202
      %s205 = sadd.s32 %s204, 1
      %p208 = scmp.eq.s32.totalorder %s29, 1
      %p209 = scmp.ne.s32.totalorder %s204, %s206
      %p210 = scmp.eq.s32.totalorder %s29, 0
      %p211 = por %p209, %p210
      %p212 = scmp.ne.s32.totalorder %s204, %s206
      %p213 = scmp.eq.s32.totalorder %s34, 1
      %p214 = por %p212, %p213
      %p215 = scmp.ne.s32.totalorder %s206, %s207
      %p216 = scmp.eq.s32.totalorder %s34, 0
      %p217 = por %p215, %p216
      %p218 = scmp.ne.s32.totalorder %s206, %s207
      %p219 = scmp.eq.s32.totalorder %s35, 1
      %p220 = por %p218, %p219
      %p222 = scmp.ne.s32.totalorder %s207, %s221
      %p223 = scmp.eq.s32.totalorder %s35, 0
      %p224 = por %p222, %p223
      %s226 = sadd.s32 %s225, 1
      %p229 = scmp.eq.s32.totalorder %s29, 1
      %p230 = scmp.ne.s32.totalorder %s225, %s227
      %p231 = scmp.eq.s32.totalorder %s29, 0
      %p232 = por %p230, %p231
      %p233 = scmp.ne.s32.totalorder %s225, %s227
      %p234 = scmp.eq.s32.totalorder %s34, 1
      %p235 = por %p233, %p234
      %p236 = scmp.ne.s32.totalorder %s227, %s228
      %p237 = scmp.eq.s32.totalorder %s34, 0
      %p238 = por %p236, %p237
      %p239 = scmp.ne.s32.totalorder %s227, %s228
      %p240 = scmp.eq.s32.totalorder %s35, 1
      %p241 = por %p239, %p240
      %p243 = scmp.ne.s32.totalorder %s228, %s242
      %p244 = scmp.eq.s32.totalorder %s35, 0
      %p245 = por %p243, %p244
      %s247 = sadd.s32 %s246, 1
      %p250 = scmp.eq.s32.totalorder %s29, 1
      %p251 = scmp.ne.s32.totalorder %s246, %s248
      %p252 = scmp.eq.s32.totalorder %s29, 0
      %p253 = por %p251, %p252
      %p254 = scmp.ne.s32.totalorder %s246, %s248
      %p255 = scmp.eq.s32.totalorder %s34, 1
      %p256 = por %p254, %p255
      %p257 = scmp.ne.s32.totalorder %s248, %s249
      %p258 = scmp.eq.s32.totalorder %s34, 0
      %p259 = por %p257, %p258
      %p260 = scmp.ne.s32.totalorder %s248, %s249
      %p261 = scmp.eq.s32.totalorder %s35, 1
      %p262 = por %p260, %p261
      %p264 = scmp.ne.s32.totalorder %s249, %s263
      %p265 = scmp.eq.s32.totalorder %s35, 0
      %p266 = por %p264, %p265
      %s267 = ssub.s32 %s29, %s36
      %p268 = scmp.eq.s32.totalorder %s267, 0
      %s270 = sadd.s32 %s269, 1
      %s271 = scalar_select %p268, %s269, %s270
      %p274 = pneg %p268
      %p275 = scmp.eq.s32.totalorder %s29, 1
      %p276 = por %p274, %p275
      %p277 = scmp.ne.s32.totalorder %s269, %s272
      %p278 = scmp.eq.s32.totalorder %s29, 0
      %p279 = por %p277, %p278
      %p280 = scmp.ne.s32.totalorder %s269, %s272
      %p281 = scmp.eq.s32.totalorder %s34, 1
      %p282 = por %p280, %p281
      %p283 = scmp.ne.s32.totalorder %s272, %s273
      %p284 = scmp.eq.s32.totalorder %s34, 0
      %p285 = por %p283, %p284
      %p286 = scmp.ne.s32.totalorder %s272, %s273
      %p287 = scmp.eq.s32.totalorder %s35, 1
      %p288 = por %p286, %p287
      %p290 = scmp.ne.s32.totalorder %s273, %s289
      %p291 = scmp.eq.s32.totalorder %s35, 0
      %p292 = por %p290, %p291
      %s293 = ssub.s32 %s29, %s36
      %p294 = scmp.eq.s32.totalorder %s293, 0
      %s296 = sadd.s32 %s295, 1
      %s297 = scalar_select %p294, %s295, %s296
      %p300 = pneg %p294
      %p301 = scmp.eq.s32.totalorder %s29, 1
      %p302 = por %p300, %p301
      %p303 = scmp.ne.s32.totalorder %s295, %s298
      %p304 = scmp.eq.s32.totalorder %s29, 0
      %p305 = por %p303, %p304
      %p306 = scmp.ne.s32.totalorder %s295, %s298
      %p307 = scmp.eq.s32.totalorder %s34, 1
      %p308 = por %p306, %p307
      %p309 = scmp.ne.s32.totalorder %s298, %s299
      %p310 = scmp.eq.s32.totalorder %s34, 0
      %p311 = por %p309, %p310
      %p312 = scmp.ne.s32.totalorder %s298, %s299
      %p313 = scmp.eq.s32.totalorder %s35, 1
      %p314 = por %p312, %p313
      %p316 = scmp.ne.s32.totalorder %s299, %s315
      %p317 = scmp.eq.s32.totalorder %s35, 0
      %p318 = por %p316, %p317
      %p319 = scmp.le.s32.totalorder 1, %s29
      %p320 = scmp.lt.s32.totalorder %s29, 3
      %p321 = pnand %p319, %p320
      %p322 = pneg %p321
      // Predicated region
      $region9: #{tpu_custom_call.1} parent=5 // pred_check
        _
      $region10: #{tpu_custom_call.1} parent=5 // pred_check_branch
        %324 = sbr.rel (%p321) target = $region12
      $region11: #{tpu_custom_call.1} parent=5 // pred_region
        %s325 = ssub.s32 %s29, 1
        // Predicated region
        $region13: #{tpu_custom_call.1} parent=11 // pred_check
          %p326 = pneg %p154
        $region14: #{tpu_custom_call.1} parent=11 // pred_check_branch
          %328 = sbr.rel (%p326) target = $region16
        $region15: #{tpu_custom_call.1} parent=11 // pred_region
          %s330 = ssub.s32 256, 256
          %331 = vsyncadd [#allocation8], %s330
          %s332 = sshll.u32 [#allocation9], 4
          %s333 = int_to_ptr.vmem [resolvable:$true] %s332
          %338 = dma.hbm_to_vmem [thread:$0]  %s4, 256, %s333, [#allocation8], 128, 128, 8
        $region16: #{tpu_custom_call.1} parent=11 // pred_fallthru
          _
        // Predicated region
        $region17: #{tpu_custom_call.1} parent=11 // pred_check
          %p339 = pneg %p175
        $region18: #{tpu_custom_call.1} parent=11 // pred_check_branch
          %341 = sbr.rel (%p339) target = $region20
        $region19: #{tpu_custom_call.1} parent=11 // pred_region
          _
        $region20: #{tpu_custom_call.1} parent=11 // pred_fallthru
          _
        // Predicated region
        $region21: #{tpu_custom_call.1} parent=11 // pred_check
          %p342 = pneg %p196
        $region22: #{tpu_custom_call.1} parent=11 // pred_check_branch
          %344 = sbr.rel (%p342) target = $region24
        $region23: #{tpu_custom_call.1} parent=11 // pred_region
          %s346 = ssub.s32 512, 512
          %347 = vsyncadd [#allocation11], %s346
          %s348 = sshll.u32 [#allocation10], 4
          %s349 = int_to_ptr.vmem [resolvable:$true] %s348
          %354 = dma.hbm_to_vmem [thread:$0]  %s6, 512, %s349, [#allocation11], 128, 128, 8
        $region24: #{tpu_custom_call.1} parent=11 // pred_fallthru
          _
        // Predicated region
        $region25: #{tpu_custom_call.1} parent=11 // pred_check
          %p355 = pneg %p217
        $region26: #{tpu_custom_call.1} parent=11 // pred_check_branch
          %357 = sbr.rel (%p355) target = $region28
        $region27: #{tpu_custom_call.1} parent=11 // pred_region
          %s359 = ssub.s32 256, 256
          %360 = vsyncadd [#allocation11], %s359
          %s361 = sshll.u32 [#allocation12], 4
          %s362 = int_to_ptr.vmem [resolvable:$true] %s361
          %367 = dma.hbm_to_vmem [thread:$0]  %s7, 256, %s362, [#allocation11], 128, 128, 8
        $region28: #{tpu_custom_call.1} parent=11 // pred_fallthru
          _
        // Predicated region
        $region29: #{tpu_custom_call.1} parent=11 // pred_check
          %p368 = pneg %p238
        $region30: #{tpu_custom_call.1} parent=11 // pred_check_branch
          %370 = sbr.rel (%p368) target = $region32
        $region31: #{tpu_custom_call.1} parent=11 // pred_region
          %s372 = ssub.s32 512, 512
          %373 = vsyncadd [#allocation14], %s372
          %s374 = sshll.u32 [#allocation13], 4
          %s375 = int_to_ptr.vmem [resolvable:$true] %s374
          %380 = dma.hbm_to_vmem [thread:$0]  %s8, 512, %s375, [#allocation14], 128, 128, 8
        $region32: #{tpu_custom_call.1} parent=11 // pred_fallthru
          _
        // Predicated region
        $region33: #{tpu_custom_call.1} parent=11 // pred_check
          %p381 = pneg %p259
        $region34: #{tpu_custom_call.1} parent=11 // pred_check_branch
          %383 = sbr.rel (%p381) target = $region36
        $region35: #{tpu_custom_call.1} parent=11 // pred_region
          _
        $region36: #{tpu_custom_call.1} parent=11 // pred_fallthru
          _
      $region12: #{tpu_custom_call.1} parent=5 // pred_fallthru
        _
      %p384 = scmp.lt.s32.totalorder %s29, 2
      // Predicated region
      $region37: #{tpu_custom_call.1} parent=5 // pred_check
        %p385 = pneg %p384
      $region38: #{tpu_custom_call.1} parent=5 // pred_check_branch
        %387 = sbr.rel (%p385) target = $region40
      $region39: #{tpu_custom_call.1} parent=5 // pred_region
        // Predicated region
        $region41: #{tpu_custom_call.1} parent=39 // pred_check
          %p388 = pneg %p49
        $region42: #{tpu_custom_call.1} parent=39 // pred_check_branch
          %390 = sbr.rel (%p388) target = $region44
        $region43: #{tpu_custom_call.1} parent=39 // pred_region
          %s391 = sand.u32 %s39, 1
          %s392 = scalar_lea.sflag [#allocation3], %s391
          %s393 = sand.u32 %s39, 1
          %s394 = smul.addr %s393, 16
          %s395 = scalar_lea.vmem [#allocation2], %s394
          %s397 = ssub.s32 256, 256
          %398 = vsyncadd %s392, %s397
          %s399 = smul.addr %s29, 2
          %s400 = smul.addr %s399, 128
          %s401 = scalar_lea.hbm %s0, %s400
          %s402 = sshll.u32 %s395, 4
          %s403 = int_to_ptr.vmem [resolvable:$true] %s402
          %408 = dma.hbm_to_vmem [thread:$0]  %s401, 256, %s403, %s392, 128, 128, 8
        $region44: #{tpu_custom_call.1} parent=39 // pred_fallthru
          _
        // Predicated region
        $region45: #{tpu_custom_call.1} parent=39 // pred_check
          %p409 = pneg %p75
        $region46: #{tpu_custom_call.1} parent=39 // pred_check_branch
          %411 = sbr.rel (%p409) target = $region48
        $region47: #{tpu_custom_call.1} parent=39 // pred_region
          %s412 = sand.u32 %s29, 1
          %s413 = scalar_lea.sflag [#allocation5], %s412
          %s414 = sand.u32 %s65, 1
          %s415 = smul.addr %s414, 16
          %s416 = scalar_lea.vmem [#allocation4], %s415
          %s418 = ssub.s32 256, 256
          %419 = vsyncadd %s413, %s418
          %s420 = smul.addr %s29, 2
          %s421 = smul.addr %s420, 128
          %s422 = scalar_lea.hbm %s1, %s421
          %s423 = sshll.u32 %s416, 4
          %s424 = int_to_ptr.vmem [resolvable:$true] %s423
          %429 = dma.hbm_to_vmem [thread:$0]  %s422, 256, %s424, %s413, 128, 128, 8
        $region48: #{tpu_custom_call.1} parent=39 // pred_fallthru
          _
        // Predicated region
        $region49: #{tpu_custom_call.1} parent=39 // pred_check
          %p430 = pneg %p101
        $region50: #{tpu_custom_call.1} parent=39 // pred_check_branch
          %432 = sbr.rel (%p430) target = $region52
        $region51: #{tpu_custom_call.1} parent=39 // pred_region
          %s433 = sand.u32 %s29, 1
          %s434 = scalar_lea.sflag [#allocation5], %s433
          %s435 = sand.u32 %s91, 1
          %s436 = smul.addr %s435, 16
          %s437 = scalar_lea.vmem [#allocation6], %s436
          %s439 = ssub.s32 256, 256
          %440 = vsyncadd %s434, %s439
          %s441 = smul.addr %s29, 2
          %s442 = smul.addr %s441, 128
          %s443 = scalar_lea.hbm %s2, %s442
          %s444 = sshll.u32 %s437, 4
          %s445 = int_to_ptr.vmem [resolvable:$true] %s444
          %450 = dma.hbm_to_vmem [thread:$0]  %s443, 256, %s445, %s434, 128, 128, 8
        $region52: #{tpu_custom_call.1} parent=39 // pred_fallthru
          _
        // Predicated region
        $region53: #{tpu_custom_call.1} parent=39 // pred_check
          %p451 = pneg %p127
        $region54: #{tpu_custom_call.1} parent=39 // pred_check_branch
          %453 = sbr.rel (%p451) target = $region56
        $region55: #{tpu_custom_call.1} parent=39 // pred_region
          %s454 = sand.u32 %s29, 1
          %s455 = scalar_lea.sflag [#allocation8], %s454
          %s456 = sand.u32 %s117, 1
          %s457 = smul.addr %s456, 16
          %s458 = scalar_lea.vmem [#allocation7], %s457
          %s460 = ssub.s32 256, 256
          %461 = vsyncadd %s455, %s460
          %s462 = smul.addr %s29, 2
          %s463 = smul.addr %s462, 128
          %s464 = scalar_lea.hbm %s3, %s463
          %s465 = sshll.u32 %s458, 4
          %s466 = int_to_ptr.vmem [resolvable:$true] %s465
          %471 = dma.hbm_to_vmem [thread:$0]  %s464, 256, %s466, %s455, 128, 128, 8
        $region56: #{tpu_custom_call.1} parent=39 // pred_fallthru
          _
      $region40: #{tpu_custom_call.1} parent=5 // pred_fallthru
        _
      %p472 = scmp.le.s32.totalorder 1, %s29
      %p473 = scmp.lt.s32.totalorder %s29, 3
      %p474 = pnand %p472, %p473
      %p475 = pneg %p474
      // Predicated region
      $region57: #{tpu_custom_call.1} parent=5 // pred_check
        _
      $region58: #{tpu_custom_call.1} parent=5 // pred_check_branch
        %477 = sbr.rel (%p474) target = $region60
      $region59: #{tpu_custom_call.1} parent=5 // pred_region
        %s478 = ssub.s32 %s29, 1
        %s479 = sand.u32 %s42, 1
        %s480 = scalar_lea.sflag [#allocation3], %s479
        %s481 = sand.u32 %s42, 1
        %s482 = smul.addr %s481, 16
        %s483 = scalar_lea.vmem [#allocation2], %s482
        // Predicated region
        $region61: #{tpu_custom_call.1} parent=59 // pred_check
          %p484 = pneg %p55
        $region62: #{tpu_custom_call.1} parent=59 // pred_check_branch
          %486 = sbr.rel (%p484) target = $region64
        $region63: #{tpu_custom_call.1} parent=59 // pred_region
          %487 = dma.done %s480, 256
        $region64: #{tpu_custom_call.1} parent=59 // pred_fallthru
          _
        %s488 = sand.u32 %s34, 1
        %s489 = scalar_lea.sflag [#allocation5], %s488
        %s490 = sand.u32 %s68, 1
        %s491 = smul.addr %s490, 16
        %s492 = scalar_lea.vmem [#allocation4], %s491
        // Predicated region
        $region65: #{tpu_custom_call.1} parent=59 // pred_check
          %p493 = pneg %p81
        $region66: #{tpu_custom_call.1} parent=59 // pred_check_branch
          %495 = sbr.rel (%p493) target = $region68
        $region67: #{tpu_custom_call.1} parent=59 // pred_region
          %496 = dma.done %s489, 256
        $region68: #{tpu_custom_call.1} parent=59 // pred_fallthru
          _
        %s497 = sand.u32 %s34, 1
        %s498 = scalar_lea.sflag [#allocation5], %s497
        %s499 = sand.u32 %s94, 1
        %s500 = smul.addr %s499, 16
        %s501 = scalar_lea.vmem [#allocation6], %s500
        // Predicated region
        $region69: #{tpu_custom_call.1} parent=59 // pred_check
          %p502 = pneg %p107
        $region70: #{tpu_custom_call.1} parent=59 // pred_check_branch
          %504 = sbr.rel (%p502) target = $region72
        $region71: #{tpu_custom_call.1} parent=59 // pred_region
          %505 = dma.done %s498, 256
        $region72: #{tpu_custom_call.1} parent=59 // pred_fallthru
          _
        %s506 = sand.u32 %s34, 1
        %s507 = scalar_lea.sflag [#allocation8], %s506
        %s508 = sand.u32 %s120, 1
        %s509 = smul.addr %s508, 16
        %s510 = scalar_lea.vmem [#allocation7], %s509
        // Predicated region
        $region73: #{tpu_custom_call.1} parent=59 // pred_check
          %p511 = pneg %p133
        $region74: #{tpu_custom_call.1} parent=59 // pred_check_branch
          %513 = sbr.rel (%p511) target = $region76
        $region75: #{tpu_custom_call.1} parent=59 // pred_region
          %514 = dma.done %s507, 256
        $region76: #{tpu_custom_call.1} parent=59 // pred_fallthru
          _
        // Predicated region
        $region77: #{tpu_custom_call.1} parent=59 // pred_check
          %p515 = pneg %p154
        $region78: #{tpu_custom_call.1} parent=59 // pred_check_branch
          %517 = sbr.rel (%p515) target = $region80
        $region79: #{tpu_custom_call.1} parent=59 // pred_region
          %518 = dma.done [#allocation8], 256
        $region80: #{tpu_custom_call.1} parent=59 // pred_fallthru
          _
        // Predicated region
        $region81: #{tpu_custom_call.1} parent=59 // pred_check
          %p519 = pneg %p196
        $region82: #{tpu_custom_call.1} parent=59 // pred_check_branch
          %521 = sbr.rel (%p519) target = $region84
        $region83: #{tpu_custom_call.1} parent=59 // pred_region
          %522 = dma.done [#allocation11], 512
        $region84: #{tpu_custom_call.1} parent=59 // pred_fallthru
          _
        // Predicated region
        $region85: #{tpu_custom_call.1} parent=59 // pred_check
          %p523 = pneg %p217
        $region86: #{tpu_custom_call.1} parent=59 // pred_check_branch
          %525 = sbr.rel (%p523) target = $region88
        $region87: #{tpu_custom_call.1} parent=59 // pred_region
          %526 = dma.done [#allocation11], 256
        $region88: #{tpu_custom_call.1} parent=59 // pred_fallthru
          _
        // Predicated region
        $region89: #{tpu_custom_call.1} parent=59 // pred_check
          %p527 = pneg %p238
        $region90: #{tpu_custom_call.1} parent=59 // pred_check_branch
          %529 = sbr.rel (%p527) target = $region92
        $region91: #{tpu_custom_call.1} parent=59 // pred_region
          %530 = dma.done [#allocation14], 512
        $region92: #{tpu_custom_call.1} parent=59 // pred_fallthru
          _
        %s531 = sand.u32 %s42, 1
        %s532 = scalar_lea.sflag [#allocation3], %s531
        %s533 = sand.u32 %s42, 1
        %s534 = smul.addr %s533, 16
        %s535 = scalar_lea.vmem [#allocation2], %s534
        %p536 = pneg %p55
        %p537 = pneg %p52
        %s538 = sand.u32 %s34, 1
        %s539 = scalar_lea.sflag [#allocation5], %s538
        %s540 = sand.u32 %s68, 1
        %s541 = smul.addr %s540, 16
        %s542 = scalar_lea.vmem [#allocation4], %s541
        %p543 = pneg %p81
        %p544 = pneg %p78
        %s545 = sand.u32 %s34, 1
        %s546 = scalar_lea.sflag [#allocation5], %s545
        %s547 = sand.u32 %s94, 1
        %s548 = smul.addr %s547, 16
        %s549 = scalar_lea.vmem [#allocation6], %s548
        %p550 = pneg %p107
        %p551 = pneg %p104
        %s552 = sand.u32 %s34, 1
        %s553 = scalar_lea.sflag [#allocation8], %s552
        %s554 = sand.u32 %s120, 1
        %s555 = smul.addr %s554, 16
        %s556 = scalar_lea.vmem [#allocation7], %s555
        %p557 = pneg %p133
        %p558 = pneg %p130
        %p559 = pneg %p154
        %p560 = pneg %p151
        %p561 = pneg %p175
        %p562 = pneg %p172
        %p563 = pneg %p196
        %p564 = pneg %p193
        %p565 = pneg %p217
        %p566 = pneg %p214
        %p567 = pneg %p238
        %p568 = pneg %p235
        %p569 = pneg %p259
        %p570 = pneg %p256
        %p571 = pneg %p285
        %p572 = pneg %p282
        %p573 = scmp.lt.s32.totalorder %s34, 1
        %s574 = scalar_select %p573, %s34, 1
        %s575 = smul.addr %s574, 4
        %s576 = smul.addr %s575, 8
        %s577 = scalar_lea.vmem %s10, %s576
        %p578 = pneg %p311
        %p579 = pneg %p308
        %p580 = scmp.lt.s32.totalorder %s34, 1
        %s581 = scalar_select %p580, %s34, 1
        %s582 = smul.addr %s581, 4
        %s583 = smul.addr %s582, 8
        %s584 = scalar_lea.vmem %s11, %s583
        %p585 = scmp.lt.s32.totalorder %s34, 1
        %s586 = scalar_select %p585, %s34, 1
        %s587 = smul.addr %s586, 4
        %s588 = smul.addr %s587, 8
        %s589 = scalar_lea.vmem %s10, %s588
        %p590 = scmp.lt.s32.totalorder %s34, 1
        %s591 = scalar_select %p590, %s34, 1
        %s592 = smul.addr %s591, 4
        %s593 = smul.addr %s592, 8
        %s594 = scalar_lea.vmem %s11, %s593
        %v595 = vld [vmem:[%s483] sm:$0xff]
        %v596 = vld [vmem:[%s483 + $0x8] sm:$0xff]
        %v597 = vld [vmem:[%s492] sm:$0xff]
        %v598 = vld [vmem:[%s492 + $0x8] sm:$0xff]
        %v599 = vld [vmem:[#allocation9] sm:$0xff]
        %v600 = vld [vmem:[#allocation9 + $0x8] sm:$0xff]
        %vm601 = vcmask 261120
        %v603 = vsel %vm601, %v595, 0
        %v606 = vsel %vm601, %v596, 0
        %v609 = vsel %vm601, %v597, 0
        %v612 = vsel %vm601, %v598, 0
        %614 = vmatprep.subr.mxu0 0.0
        %615 = vmatpush1.xpose.msra.mxu0 %v609
        %616 = vmatprep.subr.mxu0 0.0
        %617 = vmatpush1.xpose.msra.mxu0 %v612
        %618 = vmatprep.subr.mxu0 0.0
        %619 = vmatpush1.xpose.msra.mxu0 0.0
        %620 = vmatprep.subr.mxu0 0.0
        %621 = vmatpush1.xpose.msra.mxu0 0.0
        %622 = vmatprep.subr.mxu0 0.0
        %623 = vmatpush1.xpose.msra.mxu0 0.0
        %624 = vmatprep.subr.mxu0 0.0
        %625 = vmatpush1.xpose.msra.mxu0 0.0
        %626 = vmatprep.subr.mxu0 0.0
        %627 = vmatpush1.xpose.msra.mxu0 0.0
        %628 = vmatprep.subr.mxu0 0.0
        %629 = vmatpush1.xpose.msra.mxu0 0.0
        %630 = vmatprep.subr.mxu0 0.0
        %631 = vmatpush1.xpose.msra.mxu0 0.0
        %632 = vmatprep.subr.mxu0 0.0
        %633 = vmatpush1.xpose.msra.mxu0 0.0
        %634 = vmatprep.subr.mxu0 0.0
        %635 = vmatpush1.xpose.msra.mxu0 0.0
        %636 = vmatprep.subr.mxu0 0.0
        %637 = vmatpush1.xpose.msra.mxu0 0.0
        %638 = vmatprep.subr.mxu0 0.0
        %639 = vmatpush1.xpose.msra.mxu0 0.0
        %640 = vmatprep.subr.mxu0 0.0
        %641 = vmatpush1.xpose.msra.mxu0 0.0
        %642 = vmatprep.subr.mxu0 0.0
        %643 = vmatpush1.xpose.msra.mxu0 0.0
        %644 = vmatprep.subr.mxu0 0.0
        %645 = vmatpush1.xpose.msra.mxu0 0.0
        %646 = vmatprep.subr.mxu0 0.0
        %647 = vmatpush1.xpose.msra.mxu0 0.0
        %648 = vmatprep.subr.mxu0 0.0
        %649 = vmatpush1.xpose.msra.mxu0 0.0
        %650 = vmatprep.subr.mxu0 0.0
        %651 = vmatpush1.xpose.msra.mxu0 0.0
        %652 = vmatprep.subr.mxu0 0.0
        %653 = vmatpush1.xpose.msra.mxu0 0.0
        %654 = vmatprep.subr.mxu0 0.0
        %655 = vmatpush1.xpose.msra.mxu0 0.0
        %656 = vmatprep.subr.mxu0 0.0
        %657 = vmatpush1.xpose.msra.mxu0 0.0
        %658 = vmatprep.subr.mxu0 0.0
        %659 = vmatpush1.xpose.msra.mxu0 0.0
        %660 = vmatprep.subr.mxu0 0.0
        %661 = vmatpush1.xpose.msra.mxu0 0.0
        %662 = vmatprep.subr.mxu0 0.0
        %663 = vmatpush1.xpose.msra.mxu0 0.0
        %664 = vmatprep.subr.mxu0 0.0
        %665 = vmatpush1.xpose.msra.mxu0 0.0
        %666 = vmatprep.subr.mxu0 0.0
        %667 = vmatpush1.xpose.msra.mxu0 0.0
        %668 = vmatprep.subr.mxu0 0.0
        %669 = vmatpush1.xpose.msra.mxu0 0.0
        %670 = vmatprep.subr.mxu0 0.0
        %671 = vmatpush1.xpose.msra.mxu0 0.0
        %672 = vmatprep.subr.mxu0 0.0
        %673 = vmatpush1.xpose.msra.mxu0 0.0
        %674 = vmatprep.subr.mxu0 0.0
        %675 = vmatpush1.xpose.msra.mxu0 0.0
        %676 = vmatprep.subr.mxu0 0.0
        %677 = vmatpush1.xpose.msra.mxu0 0.0
        %678 = vmatprep.mubr.f32.mxu0 0.0
        %679 = vmatmul.mubr.f32.gmra.mrb[0].mxu0 %v603
        %v680 = vpop.f32.mrb[0].mxu0
        %v681 = vadd.f32 0.0, %v680
        %v682 = vpop.f32.mrb[0].mxu0
        %683 = vmatprep.mubr.f32.mxu0 0.0
        %684 = vmatmul.mubr.f32.gmra.mrb[0].mxu0 %v606
        %v685 = vpop.f32.mrb[0].mxu0
        %v686 = vadd.f32 0.0, %v685
        %v687 = vpop.f32.mrb[0].mxu0
        %688 = vdwg.mxu0
        %v689 = vmul.f32 %v681, 0.17677669
        %v690 = vmul.f32 %v686, 0.17677669
        %v691 = vadd.f32 %v689, %v599
        %v692 = vadd.f32 %v690, %v600
        %vm693 = vcmask 130048
        %v694 = vsel %vm693, %v691, -inf
        %695 = vmax.xlane.f32.xlu0 %v694
        %v696 = vpop.xlane.xlu0 %695
        %v697 = vsel %vm693, %v692, -inf
        %698 = vmax.xlane.f32.xlu0 %v697
        %v699 = vpop.xlane.xlu0 %698
        %v700 = vsub.f32 %v691, %v696
        %v701 = vsub.f32 %v692, %v699
        %v702 = vmul.f32 %v700, 1.442695
        %v703 = vpow.pop %v702
        %v704 = vmul.f32 %v701, 1.442695
        %v705 = vpow.pop %v704
        %v706 = vsel %vm693, %v703, 0.0
        %707 = vadd.xlane.f32.xlu0 %v706
        %v708 = vpop.xlane.xlu0 %707
        %v709 = vsel %vm693, %v705, 0.0
        %710 = vadd.xlane.f32.xlu0 %v709
        %v711 = vpop.xlane.xlu0 %710
        %v712 = vrcp.pop %v708
        %v713 = vrcp.pop %v711
        %v714 = vmul.f32 %v703, %v712
        %v715 = vmul.f32 %v705, %v713
        %716 = vrot.lane.b32.xlu0 %v595, 96
        %v717 = vpop.permute.xlu0 %716
        %718 = vrot.lane.b32.xlu0 %v596, 96
        %v719 = vpop.permute.xlu0 %718
        %720 = vrot.lane.b32.xlu0 %v597, 96
        %v721 = vpop.permute.xlu0 %720
        %722 = vrot.lane.b32.xlu0 %v598, 96
        %v723 = vpop.permute.xlu0 %722
        %v724 = vsel %vm601, %v717, 0
        %v726 = vsel %vm601, %v719, 0
        %v728 = vsel %vm601, %v721, 0
        %v730 = vsel %vm601, %v723, 0
        %732 = vmatprep.subr.mxu0 0.0
        %733 = vmatpush1.xpose.msra.mxu0 %v728
        %734 = vmatprep.subr.mxu0 0.0
        %735 = vmatpush1.xpose.msra.mxu0 %v730
        %736 = vmatprep.subr.mxu0 0.0
        %737 = vmatpush1.xpose.msra.mxu0 0.0
        %738 = vmatprep.subr.mxu0 0.0
        %739 = vmatpush1.xpose.msra.mxu0 0.0
        %740 = vmatprep.subr.mxu0 0.0
        %741 = vmatpush1.xpose.msra.mxu0 0.0
        %742 = vmatprep.subr.mxu0 0.0
        %743 = vmatpush1.xpose.msra.mxu0 0.0
        %744 = vmatprep.subr.mxu0 0.0
        %745 = vmatpush1.xpose.msra.mxu0 0.0
        %746 = vmatprep.subr.mxu0 0.0
        %747 = vmatpush1.xpose.msra.mxu0 0.0
        %748 = vmatprep.subr.mxu0 0.0
        %749 = vmatpush1.xpose.msra.mxu0 0.0
        %750 = vmatprep.subr.mxu0 0.0
        %751 = vmatpush1.xpose.msra.mxu0 0.0
        %752 = vmatprep.subr.mxu0 0.0
        %753 = vmatpush1.xpose.msra.mxu0 0.0
        %754 = vmatprep.subr.mxu0 0.0
        %755 = vmatpush1.xpose.msra.mxu0 0.0
        %756 = vmatprep.subr.mxu0 0.0
        %757 = vmatpush1.xpose.msra.mxu0 0.0
        %758 = vmatprep.subr.mxu0 0.0
        %759 = vmatpush1.xpose.msra.mxu0 0.0
        %760 = vmatprep.subr.mxu0 0.0
        %761 = vmatpush1.xpose.msra.mxu0 0.0
        %762 = vmatprep.subr.mxu0 0.0
        %763 = vmatpush1.xpose.msra.mxu0 0.0
        %764 = vmatprep.subr.mxu0 0.0
        %765 = vmatpush1.xpose.msra.mxu0 0.0
        %766 = vmatprep.subr.mxu0 0.0
        %767 = vmatpush1.xpose.msra.mxu0 0.0
        %768 = vmatprep.subr.mxu0 0.0
        %769 = vmatpush1.xpose.msra.mxu0 0.0
        %770 = vmatprep.subr.mxu0 0.0
        %771 = vmatpush1.xpose.msra.mxu0 0.0
        %772 = vmatprep.subr.mxu0 0.0
        %773 = vmatpush1.xpose.msra.mxu0 0.0
        %774 = vmatprep.subr.mxu0 0.0
        %775 = vmatpush1.xpose.msra.mxu0 0.0
        %776 = vmatprep.subr.mxu0 0.0
        %777 = vmatpush1.xpose.msra.mxu0 0.0
        %778 = vmatprep.subr.mxu0 0.0
        %779 = vmatpush1.xpose.msra.mxu0 0.0
        %780 = vmatprep.subr.mxu0 0.0
        %781 = vmatpush1.xpose.msra.mxu0 0.0
        %782 = vmatprep.subr.mxu0 0.0
        %783 = vmatpush1.xpose.msra.mxu0 0.0
        %784 = vmatprep.subr.mxu0 0.0
        %785 = vmatpush1.xpose.msra.mxu0 0.0
        %786 = vmatprep.subr.mxu0 0.0
        %787 = vmatpush1.xpose.msra.mxu0 0.0
        %788 = vmatprep.subr.mxu0 0.0
        %789 = vmatpush1.xpose.msra.mxu0 0.0
        %790 = vmatprep.subr.mxu0 0.0
        %791 = vmatpush1.xpose.msra.mxu0 0.0
        %792 = vmatprep.subr.mxu0 0.0
        %793 = vmatpush1.xpose.msra.mxu0 0.0
        %794 = vmatprep.subr.mxu0 0.0
        %795 = vmatpush1.xpose.msra.mxu0 0.0
        %796 = vmatprep.mubr.f32.mxu0 0.0
        %797 = vmatmul.mubr.f32.gmra.mrb[0].mxu0 %v724
        %v798 = vpop.f32.mrb[0].mxu0
        %v799 = vadd.f32 0.0, %v798
        %v800 = vpop.f32.mrb[0].mxu0
        %801 = vmatprep.mubr.f32.mxu0 0.0
        %802 = vmatmul.mubr.f32.gmra.mrb[0].mxu0 %v726
        %v803 = vpop.f32.mrb[0].mxu0
        %v804 = vadd.f32 0.0, %v803
        %v805 = vpop.f32.mrb[0].mxu0
        %806 = vdwg.mxu0
        %v807 = vmul.f32 %v799, 0.17677669
        %v808 = vmul.f32 %v804, 0.17677669
        %v809 = vadd.f32 %v807, %v599
        %v810 = vadd.f32 %v808, %v600
        %v811 = vsel %vm693, %v809, -inf
        %812 = vmax.xlane.f32.xlu0 %v811
        %v813 = vpop.xlane.xlu0 %812
        %v814 = vsel %vm693, %v810, -inf
        %815 = vmax.xlane.f32.xlu0 %v814
        %v816 = vpop.xlane.xlu0 %815
        %v817 = vsub.f32 %v809, %v813
        %v818 = vsub.f32 %v810, %v816
        %v819 = vmul.f32 %v817, 1.442695
        %v820 = vpow.pop %v819
        %v821 = vmul.f32 %v818, 1.442695
        %v822 = vpow.pop %v821
        %v823 = vsel %vm693, %v820, 0.0
        %824 = vadd.xlane.f32.xlu0 %v823
        %v825 = vpop.xlane.xlu0 %824
        %v826 = vsel %vm693, %v822, 0.0
        %827 = vadd.xlane.f32.xlu0 %v826
        %v828 = vpop.xlane.xlu0 %827
        %v829 = vrcp.pop %v825
        %v830 = vrcp.pop %v828
        %v831 = vmul.f32 %v820, %v829
        %v832 = vmul.f32 %v822, %v830
        %v833 = vld [vmem:[#allocation10] sm:$0xff]
        %v834 = vld [vmem:[#allocation10 + $0x8] sm:$0xff]
        %v835 = vld [vmem:[#allocation10 + $0x10] sm:$0xff]
        %v836 = vld [vmem:[#allocation10 + $0x18] sm:$0xff]
        %v838 = vsel %vm601, %v833, 0
        %v841 = vsel %vm601, %v834, 0
        %v844 = vsel %vm601, %v835, 0
        %v847 = vsel %vm601, %v836, 0
        %849 = vmatprep.subr.mxu0 0.0
        %850 = vmatpush1.msra.mxu0 %v714
        %851 = vmatprep.subr.mxu0 0.0
        %852 = vmatpush1.msra.mxu0 %v715
        %853 = vmatprep.subr.mxu0 0.0
        %854 = vmatpush1.msra.mxu0 %v831
        %855 = vmatprep.subr.mxu0 0.0
        %856 = vmatpush1.msra.mxu0 %v832
        %857 = vmatprep.subr.mxu0 0.0
        %858 = vmatpush1.msra.mxu0 0.0
        %859 = vmatprep.subr.mxu0 0.0
        %860 = vmatpush1.msra.mxu0 0.0
        %861 = vmatprep.subr.mxu0 0.0
        %862 = vmatpush1.msra.mxu0 0.0
        %863 = vmatprep.subr.mxu0 0.0
        %864 = vmatpush1.msra.mxu0 0.0
        %865 = vmatprep.subr.mxu0 0.0
        %866 = vmatpush1.msra.mxu0 0.0
        %867 = vmatprep.subr.mxu0 0.0
        %868 = vmatpush1.msra.mxu0 0.0
        %869 = vmatprep.subr.mxu0 0.0
        %870 = vmatpush1.msra.mxu0 0.0
        %871 = vmatprep.subr.mxu0 0.0
        %872 = vmatpush1.msra.mxu0 0.0
        %873 = vmatprep.subr.mxu0 0.0
        %874 = vmatpush1.msra.mxu0 0.0
        %875 = vmatprep.subr.mxu0 0.0
        %876 = vmatpush1.msra.mxu0 0.0
        %877 = vmatprep.subr.mxu0 0.0
        %878 = vmatpush1.msra.mxu0 0.0
        %879 = vmatprep.subr.mxu0 0.0
        %880 = vmatpush1.msra.mxu0 0.0
        %881 = vmatprep.subr.mxu0 0.0
        %882 = vmatpush1.msra.mxu0 0.0
        %883 = vmatprep.subr.mxu0 0.0
        %884 = vmatpush1.msra.mxu0 0.0
        %885 = vmatprep.subr.mxu0 0.0
        %886 = vmatpush1.msra.mxu0 0.0
        %887 = vmatprep.subr.mxu0 0.0
        %888 = vmatpush1.msra.mxu0 0.0
        %889 = vmatprep.subr.mxu0 0.0
        %890 = vmatpush1.msra.mxu0 0.0
        %891 = vmatprep.subr.mxu0 0.0
        %892 = vmatpush1.msra.mxu0 0.0
        %893 = vmatprep.subr.mxu0 0.0
        %894 = vmatpush1.msra.mxu0 0.0
        %895 = vmatprep.subr.mxu0 0.0
        %896 = vmatpush1.msra.mxu0 0.0
        %897 = vmatprep.subr.mxu0 0.0
        %898 = vmatpush1.msra.mxu0 0.0
        %899 = vmatprep.subr.mxu0 0.0
        %900 = vmatpush1.msra.mxu0 0.0
        %901 = vmatprep.subr.mxu0 0.0
        %902 = vmatpush1.msra.mxu0 0.0
        %903 = vmatprep.subr.mxu0 0.0
        %904 = vmatpush1.msra.mxu0 0.0
        %905 = vmatprep.subr.mxu0 0.0
        %906 = vmatpush1.msra.mxu0 0.0
        %907 = vmatprep.subr.mxu0 0.0
        %908 = vmatpush1.msra.mxu0 0.0
        %909 = vmatprep.subr.mxu0 0.0
        %910 = vmatpush1.msra.mxu0 0.0
        %911 = vmatprep.subr.mxu0 0.0
        %912 = vmatpush1.msra.mxu0 0.0
        %913 = vmatprep.mubr.f32.mxu0 0.0
        %914 = vmatmul.mubr.f32.gmra.mrb[0].mxu0 %v838
        %v915 = vpop.f32.mrb[0].mxu0
        %v916 = vadd.f32 0.0, %v915
        %v917 = vpop.f32.mrb[0].mxu0
        %918 = vmatprep.mubr.f32.mxu0 0.0
        %919 = vmatmul.mubr.f32.gmra.mrb[0].mxu0 %v841
        %v920 = vpop.f32.mrb[0].mxu0
        %v921 = vadd.f32 0.0, %v920
        %v922 = vpop.f32.mrb[0].mxu0
        %923 = vmatprep.mubr.f32.mxu0 0.0
        %924 = vmatmul.mubr.f32.gmra.mrb[0].mxu0 %v844
        %v925 = vpop.f32.mrb[0].mxu0
        %v926 = vadd.f32 0.0, %v925
        %v927 = vpop.f32.mrb[0].mxu0
        %928 = vmatprep.mubr.f32.mxu0 0.0
        %929 = vmatmul.mubr.f32.gmra.mrb[0].mxu0 %v847
        %v930 = vpop.f32.mrb[0].mxu0
        %v931 = vadd.f32 0.0, %v930
        %v932 = vpop.f32.mrb[0].mxu0
        %933 = vdwg.mxu0
        %v934 = vld [vmem:[#allocation12] sm:$0xff]
        %v935 = vld [vmem:[#allocation12 + $0x8] sm:$0xff]
        %v937 = vsel %vm693, %v916, 0
        %v940 = vsel %vm693, %v921, 0
        %v943 = vsel %vm693, %v926, 0
        %v946 = vsel %vm693, %v931, 0
        %948 = vmatprep.subr.mxu0 0.0
        %949 = vmatpush1.msra.mxu0 %v934
        %950 = vmatprep.subr.mxu0 0.0
        %951 = vmatpush1.msra.mxu0 %v935
        %952 = vmatprep.subr.mxu0 0.0
        %953 = vmatpush1.msra.mxu0 0.0
        %954 = vmatprep.subr.mxu0 0.0
        %955 = vmatpush1.msra.mxu0 0.0
        %956 = vmatprep.subr.mxu0 0.0
        %957 = vmatpush1.msra.mxu0 0.0
        %958 = vmatprep.subr.mxu0 0.0
        %959 = vmatpush1.msra.mxu0 0.0
        %960 = vmatprep.subr.mxu0 0.0
        %961 = vmatpush1.msra.mxu0 0.0
        %962 = vmatprep.subr.mxu0 0.0
        %963 = vmatpush1.msra.mxu0 0.0
        %964 = vmatprep.subr.mxu0 0.0
        %965 = vmatpush1.msra.mxu0 0.0
        %966 = vmatprep.subr.mxu0 0.0
        %967 = vmatpush1.msra.mxu0 0.0
        %968 = vmatprep.subr.mxu0 0.0
        %969 = vmatpush1.msra.mxu0 0.0
        %970 = vmatprep.subr.mxu0 0.0
        %971 = vmatpush1.msra.mxu0 0.0
        %972 = vmatprep.subr.mxu0 0.0
        %973 = vmatpush1.msra.mxu0 0.0
        %974 = vmatprep.subr.mxu0 0.0
        %975 = vmatpush1.msra.mxu0 0.0
        %976 = vmatprep.subr.mxu0 0.0
        %977 = vmatpush1.msra.mxu0 0.0
        %978 = vmatprep.subr.mxu0 0.0
        %979 = vmatpush1.msra.mxu0 0.0
        %980 = vmatprep.subr.mxu0 0.0
        %981 = vmatpush1.msra.mxu0 0.0
        %982 = vmatprep.subr.mxu0 0.0
        %983 = vmatpush1.msra.mxu0 0.0
        %984 = vmatprep.subr.mxu0 0.0
        %985 = vmatpush1.msra.mxu0 0.0
        %986 = vmatprep.subr.mxu0 0.0
        %987 = vmatpush1.msra.mxu0 0.0
        %988 = vmatprep.subr.mxu0 0.0
        %989 = vmatpush1.msra.mxu0 0.0
        %990 = vmatprep.subr.mxu0 0.0
        %991 = vmatpush1.msra.mxu0 0.0
        %992 = vmatprep.subr.mxu0 0.0
        %993 = vmatpush1.msra.mxu0 0.0
        %994 = vmatprep.subr.mxu0 0.0
        %995 = vmatpush1.msra.mxu0 0.0
        %996 = vmatprep.subr.mxu0 0.0
        %997 = vmatpush1.msra.mxu0 0.0
        %998 = vmatprep.subr.mxu0 0.0
        %999 = vmatpush1.msra.mxu0 0.0
        %1000 = vmatprep.subr.mxu0 0.0
        %1001 = vmatpush1.msra.mxu0 0.0
        %1002 = vmatprep.subr.mxu0 0.0
        %1003 = vmatpush1.msra.mxu0 0.0
        %1004 = vmatprep.subr.mxu0 0.0
        %1005 = vmatpush1.msra.mxu0 0.0
        %1006 = vmatprep.subr.mxu0 0.0
        %1007 = vmatpush1.msra.mxu0 0.0
        %1008 = vmatprep.subr.mxu0 0.0
        %1009 = vmatpush1.msra.mxu0 0.0
        %1010 = vmatprep.subr.mxu0 0.0
        %1011 = vmatpush1.msra.mxu0 0.0
        %1012 = vmatprep.mubr.f32.mxu0 0.0
        %1013 = vmatmul.mubr.f32.gmra.mrb[0].mxu0 %v937
        %v1014 = vpop.f32.mrb[0].mxu0
        %v1015 = vadd.f32 0.0, %v1014
        %v1016 = vpop.f32.mrb[0].mxu0
        %1017 = vmatprep.mubr.f32.mxu0 0.0
        %1018 = vmatmul.mubr.f32.gmra.mrb[0].mxu0 %v940
        %v1019 = vpop.f32.mrb[0].mxu0
        %v1020 = vadd.f32 0.0, %v1019
        %v1021 = vpop.f32.mrb[0].mxu0
        %1022 = vmatprep.mubr.f32.mxu0 0.0
        %1023 = vmatmul.mubr.f32.gmra.mrb[0].mxu0 %v943
        %v1024 = vpop.f32.mrb[0].mxu0
        %v1025 = vadd.f32 0.0, %v1024
        %v1026 = vpop.f32.mrb[0].mxu0
        %1027 = vmatprep.mubr.f32.mxu0 0.0
        %1028 = vmatmul.mubr.f32.gmra.mrb[0].mxu0 %v946
        %v1029 = vpop.f32.mrb[0].mxu0
        %v1030 = vadd.f32 0.0, %v1029
        %v1031 = vpop.f32.mrb[0].mxu0
        %1032 = vdwg.mxu0
        %1033 = vst.msk [vmem:[%s589] sm:$0xff] %vm693, %v1015
        %1034 = vst.msk [vmem:[%s589 + $0x8] sm:$0xff] %vm693, %v1020
        %1035 = vst.msk [vmem:[%s589 + $0x10] sm:$0xff] %vm693, %v1025
        %1036 = vst.msk [vmem:[%s589 + $0x18] sm:$0xff] %vm693, %v1030
        %v1037 = vld [vmem:[%s501] sm:$0xff]
        %v1038 = vld [vmem:[%s501 + $0x8] sm:$0xff]
        %v1039 = vld [vmem:[%s510] sm:$0xff]
        %v1040 = vld [vmem:[%s510 + $0x8] sm:$0xff]
        %v1041 = vld [vmem:[%s5] sm:$0xff]
        %v1042 = vld [vmem:[%s5 + $0x8] sm:$0xff]
        %v1044 = vsel %vm601, %v1037, 0
        %v1047 = vsel %vm601, %v1038, 0
        %v1050 = vsel %vm601, %v1039, 0
        %v1053 = vsel %vm601, %v1040, 0
        %1055 = vmatprep.subr.mxu0 0.0
        %1056 = vmatpush1.xpose.msra.mxu0 %v1050
        %1057 = vmatprep.subr.mxu0 0.0
        %1058 = vmatpush1.xpose.msra.mxu0 %v1053
        %1059 = vmatprep.subr.mxu0 0.0
        %1060 = vmatpush1.xpose.msra.mxu0 0.0
        %1061 = vmatprep.subr.mxu0 0.0
        %1062 = vmatpush1.xpose.msra.mxu0 0.0
        %1063 = vmatprep.subr.mxu0 0.0
        %1064 = vmatpush1.xpose.msra.mxu0 0.0
        %1065 = vmatprep.subr.mxu0 0.0
        %1066 = vmatpush1.xpose.msra.mxu0 0.0
        %1067 = vmatprep.subr.mxu0 0.0
        %1068 = vmatpush1.xpose.msra.mxu0 0.0
        %1069 = vmatprep.subr.mxu0 0.0
        %1070 = vmatpush1.xpose.msra.mxu0 0.0
        %1071 = vmatprep.subr.mxu0 0.0
        %1072 = vmatpush1.xpose.msra.mxu0 0.0
        %1073 = vmatprep.subr.mxu0 0.0
        %1074 = vmatpush1.xpose.msra.mxu0 0.0
        %1075 = vmatprep.subr.mxu0 0.0
        %1076 = vmatpush1.xpose.msra.mxu0 0.0
        %1077 = vmatprep.subr.mxu0 0.0
        %1078 = vmatpush1.xpose.msra.mxu0 0.0
        %1079 = vmatprep.subr.mxu0 0.0
        %1080 = vmatpush1.xpose.msra.mxu0 0.0
        %1081 = vmatprep.subr.mxu0 0.0
        %1082 = vmatpush1.xpose.msra.mxu0 0.0
        %1083 = vmatprep.subr.mxu0 0.0
        %1084 = vmatpush1.xpose.msra.mxu0 0.0
        %1085 = vmatprep.subr.mxu0 0.0
        %1086 = vmatpush1.xpose.msra.mxu0 0.0
        %1087 = vmatprep.subr.mxu0 0.0
        %1088 = vmatpush1.xpose.msra.mxu0 0.0
        %1089 = vmatprep.subr.mxu0 0.0
        %1090 = vmatpush1.xpose.msra.mxu0 0.0
        %1091 = vmatprep.subr.mxu0 0.0
        %1092 = vmatpush1.xpose.msra.mxu0 0.0
        %1093 = vmatprep.subr.mxu0 0.0
        %1094 = vmatpush1.xpose.msra.mxu0 0.0
        %1095 = vmatprep.subr.mxu0 0.0
        %1096 = vmatpush1.xpose.msra.mxu0 0.0
        %1097 = vmatprep.subr.mxu0 0.0
        %1098 = vmatpush1.xpose.msra.mxu0 0.0
        %1099 = vmatprep.subr.mxu0 0.0
        %1100 = vmatpush1.xpose.msra.mxu0 0.0
        %1101 = vmatprep.subr.mxu0 0.0
        %1102 = vmatpush1.xpose.msra.mxu0 0.0
        %1103 = vmatprep.subr.mxu0 0.0
        %1104 = vmatpush1.xpose.msra.mxu0 0.0
        %1105 = vmatprep.subr.mxu0 0.0
        %1106 = vmatpush1.xpose.msra.mxu0 0.0
        %1107 = vmatprep.subr.mxu0 0.0
        %1108 = vmatpush1.xpose.msra.mxu0 0.0
        %1109 = vmatprep.subr.mxu0 0.0
        %1110 = vmatpush1.xpose.msra.mxu0 0.0
        %1111 = vmatprep.subr.mxu0 0.0
        %1112 = vmatpush1.xpose.msra.mxu0 0.0
        %1113 = vmatprep.subr.mxu0 0.0
        %1114 = vmatpush1.xpose.msra.mxu0 0.0
        %1115 = vmatprep.subr.mxu0 0.0
        %1116 = vmatpush1.xpose.msra.mxu0 0.0
        %1117 = vmatprep.subr.mxu0 0.0
        %1118 = vmatpush1.xpose.msra.mxu0 0.0
        %1119 = vmatprep.mubr.f32.mxu0 0.0
        %1120 = vmatmul.mubr.f32.gmra.mrb[0].mxu0 %v1044
        %v1121 = vpop.f32.mrb[0].mxu0
        %v1122 = vadd.f32 0.0, %v1121
        %v1123 = vpop.f32.mrb[0].mxu0
        %1124 = vmatprep.mubr.f32.mxu0 0.0
        %1125 = vmatmul.mubr.f32.gmra.mrb[0].mxu0 %v1047
        %v1126 = vpop.f32.mrb[0].mxu0
        %v1127 = vadd.f32 0.0, %v1126
        %v1128 = vpop.f32.mrb[0].mxu0
        %1129 = vdwg.mxu0
        %v1130 = vmul.f32 %v1122, 0.17677669
        %v1131 = vmul.f32 %v1127, 0.17677669
        %v1132 = vadd.f32 %v1130, %v1041
        %v1133 = vadd.f32 %v1131, %v1042
        %v1134 = vsel %vm693, %v1132, -inf
        %1135 = vmax.xlane.f32.xlu0 %v1134
        %v1136 = vpop.xlane.xlu0 %1135
        %v1137 = vsel %vm693, %v1133, -inf
        %1138 = vmax.xlane.f32.xlu0 %v1137
        %v1139 = vpop.xlane.xlu0 %1138
        %v1140 = vsub.f32 %v1132, %v1136
        %v1141 = vsub.f32 %v1133, %v1139
        %v1142 = vmul.f32 %v1140, 1.442695
        %v1143 = vpow.pop %v1142
        %v1144 = vmul.f32 %v1141, 1.442695
        %v1145 = vpow.pop %v1144
        %v1146 = vsel %vm693, %v1143, 0.0
        %1147 = vadd.xlane.f32.xlu0 %v1146
        %v1148 = vpop.xlane.xlu0 %1147
        %v1149 = vsel %vm693, %v1145, 0.0
        %1150 = vadd.xlane.f32.xlu0 %v1149
        %v1151 = vpop.xlane.xlu0 %1150
        %v1152 = vrcp.pop %v1148
        %v1153 = vrcp.pop %v1151
        %v1154 = vmul.f32 %v1143, %v1152
        %v1155 = vmul.f32 %v1145, %v1153
        %1156 = vrot.lane.b32.xlu0 %v1037, 96
        %v1157 = vpop.permute.xlu0 %1156
        %1158 = vrot.lane.b32.xlu0 %v1038, 96
        %v1159 = vpop.permute.xlu0 %1158
        %1160 = vrot.lane.b32.xlu0 %v1039, 96
        %v1161 = vpop.permute.xlu0 %1160
        %1162 = vrot.lane.b32.xlu0 %v1040, 96
        %v1163 = vpop.permute.xlu0 %1162
        %v1164 = vsel %vm601, %v1157, 0
        %v1166 = vsel %vm601, %v1159, 0
        %v1168 = vsel %vm601, %v1161, 0
        %v1170 = vsel %vm601, %v1163, 0
        %1172 = vmatprep.subr.mxu0 0.0
        %1173 = vmatpush1.xpose.msra.mxu0 %v1168
        %1174 = vmatprep.subr.mxu0 0.0
        %1175 = vmatpush1.xpose.msra.mxu0 %v1170
        %1176 = vmatprep.subr.mxu0 0.0
        %1177 = vmatpush1.xpose.msra.mxu0 0.0
        %1178 = vmatprep.subr.mxu0 0.0
        %1179 = vmatpush1.xpose.msra.mxu0 0.0
        %1180 = vmatprep.subr.mxu0 0.0
        %1181 = vmatpush1.xpose.msra.mxu0 0.0
        %1182 = vmatprep.subr.mxu0 0.0
        %1183 = vmatpush1.xpose.msra.mxu0 0.0
        %1184 = vmatprep.subr.mxu0 0.0
        %1185 = vmatpush1.xpose.msra.mxu0 0.0
        %1186 = vmatprep.subr.mxu0 0.0
        %1187 = vmatpush1.xpose.msra.mxu0 0.0
        %1188 = vmatprep.subr.mxu0 0.0
        %1189 = vmatpush1.xpose.msra.mxu0 0.0
        %1190 = vmatprep.subr.mxu0 0.0
        %1191 = vmatpush1.xpose.msra.mxu0 0.0
        %1192 = vmatprep.subr.mxu0 0.0
        %1193 = vmatpush1.xpose.msra.mxu0 0.0
        %1194 = vmatprep.subr.mxu0 0.0
        %1195 = vmatpush1.xpose.msra.mxu0 0.0
        %1196 = vmatprep.subr.mxu0 0.0
        %1197 = vmatpush1.xpose.msra.mxu0 0.0
        %1198 = vmatprep.subr.mxu0 0.0
        %1199 = vmatpush1.xpose.msra.mxu0 0.0
        %1200 = vmatprep.subr.mxu0 0.0
        %1201 = vmatpush1.xpose.msra.mxu0 0.0
        %1202 = vmatprep.subr.mxu0 0.0
        %1203 = vmatpush1.xpose.msra.mxu0 0.0
        %1204 = vmatprep.subr.mxu0 0.0
        %1205 = vmatpush1.xpose.msra.mxu0 0.0
        %1206 = vmatprep.subr.mxu0 0.0
        %1207 = vmatpush1.xpose.msra.mxu0 0.0
        %1208 = vmatprep.subr.mxu0 0.0
        %1209 = vmatpush1.xpose.msra.mxu0 0.0
        %1210 = vmatprep.subr.mxu0 0.0
        %1211 = vmatpush1.xpose.msra.mxu0 0.0
        %1212 = vmatprep.subr.mxu0 0.0
        %1213 = vmatpush1.xpose.msra.mxu0 0.0
        %1214 = vmatprep.subr.mxu0 0.0
        %1215 = vmatpush1.xpose.msra.mxu0 0.0
        %1216 = vmatprep.subr.mxu0 0.0
        %1217 = vmatpush1.xpose.msra.mxu0 0.0
        %1218 = vmatprep.subr.mxu0 0.0
        %1219 = vmatpush1.xpose.msra.mxu0 0.0
        %1220 = vmatprep.subr.mxu0 0.0
        %1221 = vmatpush1.xpose.msra.mxu0 0.0
        %1222 = vmatprep.subr.mxu0 0.0
        %1223 = vmatpush1.xpose.msra.mxu0 0.0
        %1224 = vmatprep.subr.mxu0 0.0
        %1225 = vmatpush1.xpose.msra.mxu0 0.0
        %1226 = vmatprep.subr.mxu0 0.0
        %1227 = vmatpush1.xpose.msra.mxu0 0.0
        %1228 = vmatprep.subr.mxu0 0.0
        %1229 = vmatpush1.xpose.msra.mxu0 0.0
        %1230 = vmatprep.subr.mxu0 0.0
        %1231 = vmatpush1.xpose.msra.mxu0 0.0
        %1232 = vmatprep.subr.mxu0 0.0
        %1233 = vmatpush1.xpose.msra.mxu0 0.0
        %1234 = vmatprep.subr.mxu0 0.0
        %1235 = vmatpush1.xpose.msra.mxu0 0.0
        %1236 = vmatprep.mubr.f32.mxu0 0.0
        %1237 = vmatmul.mubr.f32.gmra.mrb[0].mxu0 %v1164
        %v1238 = vpop.f32.mrb[0].mxu0
        %v1239 = vadd.f32 0.0, %v1238
        %v1240 = vpop.f32.mrb[0].mxu0
        %1241 = vmatprep.mubr.f32.mxu0 0.0
        %1242 = vmatmul.mubr.f32.gmra.mrb[0].mxu0 %v1166
        %v1243 = vpop.f32.mrb[0].mxu0
        %v1244 = vadd.f32 0.0, %v1243
        %v1245 = vpop.f32.mrb[0].mxu0
        %1246 = vdwg.mxu0
        %v1247 = vmul.f32 %v1239, 0.17677669
        %v1248 = vmul.f32 %v1244, 0.17677669
        %v1249 = vadd.f32 %v1247, %v1041
        %v1250 = vadd.f32 %v1248, %v1042
        %v1251 = vsel %vm693, %v1249, -inf
        %1252 = vmax.xlane.f32.xlu0 %v1251
        %v1253 = vpop.xlane.xlu0 %1252
        %v1254 = vsel %vm693, %v1250, -inf
        %1255 = vmax.xlane.f32.xlu0 %v1254
        %v1256 = vpop.xlane.xlu0 %1255
        %v1257 = vsub.f32 %v1249, %v1253
        %v1258 = vsub.f32 %v1250, %v1256
        %v1259 = vmul.f32 %v1257, 1.442695
        %v1260 = vpow.pop %v1259
        %v1261 = vmul.f32 %v1258, 1.442695
        %v1262 = vpow.pop %v1261
        %v1263 = vsel %vm693, %v1260, 0.0
        %1264 = vadd.xlane.f32.xlu0 %v1263
        %v1265 = vpop.xlane.xlu0 %1264
        %v1266 = vsel %vm693, %v1262, 0.0
        %1267 = vadd.xlane.f32.xlu0 %v1266
        %v1268 = vpop.xlane.xlu0 %1267
        %v1269 = vrcp.pop %v1265
        %v1270 = vrcp.pop %v1268
        %v1271 = vmul.f32 %v1260, %v1269
        %v1272 = vmul.f32 %v1262, %v1270
        %v1273 = vld [vmem:[#allocation13] sm:$0xff]
        %v1274 = vld [vmem:[#allocation13 + $0x8] sm:$0xff]
        %v1275 = vld [vmem:[#allocation13 + $0x10] sm:$0xff]
        %v1276 = vld [vmem:[#allocation13 + $0x18] sm:$0xff]
        %v1278 = vsel %vm601, %v1273, 0
        %v1281 = vsel %vm601, %v1274, 0
        %v1284 = vsel %vm601, %v1275, 0
        %v1287 = vsel %vm601, %v1276, 0
        %1289 = vmatprep.subr.mxu0 0.0
        %1290 = vmatpush1.msra.mxu0 %v1154
        %1291 = vmatprep.subr.mxu0 0.0
        %1292 = vmatpush1.msra.mxu0 %v1155
        %1293 = vmatprep.subr.mxu0 0.0
        %1294 = vmatpush1.msra.mxu0 %v1271
        %1295 = vmatprep.subr.mxu0 0.0
        %1296 = vmatpush1.msra.mxu0 %v1272
        %1297 = vmatprep.subr.mxu0 0.0
        %1298 = vmatpush1.msra.mxu0 0.0
        %1299 = vmatprep.subr.mxu0 0.0
        %1300 = vmatpush1.msra.mxu0 0.0
        %1301 = vmatprep.subr.mxu0 0.0
        %1302 = vmatpush1.msra.mxu0 0.0
        %1303 = vmatprep.subr.mxu0 0.0
        %1304 = vmatpush1.msra.mxu0 0.0
        %1305 = vmatprep.subr.mxu0 0.0
        %1306 = vmatpush1.msra.mxu0 0.0
        %1307 = vmatprep.subr.mxu0 0.0
        %1308 = vmatpush1.msra.mxu0 0.0
        %1309 = vmatprep.subr.mxu0 0.0
        %1310 = vmatpush1.msra.mxu0 0.0
        %1311 = vmatprep.subr.mxu0 0.0
        %1312 = vmatpush1.msra.mxu0 0.0
        %1313 = vmatprep.subr.mxu0 0.0
        %1314 = vmatpush1.msra.mxu0 0.0
        %1315 = vmatprep.subr.mxu0 0.0
        %1316 = vmatpush1.msra.mxu0 0.0
        %1317 = vmatprep.subr.mxu0 0.0
        %1318 = vmatpush1.msra.mxu0 0.0
        %1319 = vmatprep.subr.mxu0 0.0
        %1320 = vmatpush1.msra.mxu0 0.0
        %1321 = vmatprep.subr.mxu0 0.0
        %1322 = vmatpush1.msra.mxu0 0.0
        %1323 = vmatprep.subr.mxu0 0.0
        %1324 = vmatpush1.msra.mxu0 0.0
        %1325 = vmatprep.subr.mxu0 0.0
        %1326 = vmatpush1.msra.mxu0 0.0
        %1327 = vmatprep.subr.mxu0 0.0
        %1328 = vmatpush1.msra.mxu0 0.0
        %1329 = vmatprep.subr.mxu0 0.0
        %1330 = vmatpush1.msra.mxu0 0.0
        %1331 = vmatprep.subr.mxu0 0.0
        %1332 = vmatpush1.msra.mxu0 0.0
        %1333 = vmatprep.subr.mxu0 0.0
        %1334 = vmatpush1.msra.mxu0 0.0
        %1335 = vmatprep.subr.mxu0 0.0
        %1336 = vmatpush1.msra.mxu0 0.0
        %1337 = vmatprep.subr.mxu0 0.0
        %1338 = vmatpush1.msra.mxu0 0.0
        %1339 = vmatprep.subr.mxu0 0.0
        %1340 = vmatpush1.msra.mxu0 0.0
        %1341 = vmatprep.subr.mxu0 0.0
        %1342 = vmatpush1.msra.mxu0 0.0
        %1343 = vmatprep.subr.mxu0 0.0
        %1344 = vmatpush1.msra.mxu0 0.0
        %1345 = vmatprep.subr.mxu0 0.0
        %1346 = vmatpush1.msra.mxu0 0.0
        %1347 = vmatprep.subr.mxu0 0.0
        %1348 = vmatpush1.msra.mxu0 0.0
        %1349 = vmatprep.subr.mxu0 0.0
        %1350 = vmatpush1.msra.mxu0 0.0
        %1351 = vmatprep.subr.mxu0 0.0
        %1352 = vmatpush1.msra.mxu0 0.0
        %1353 = vmatprep.mubr.f32.mxu0 0.0
        %1354 = vmatmul.mubr.f32.gmra.mrb[0].mxu0 %v1278
        %v1355 = vpop.f32.mrb[0].mxu0
        %v1356 = vadd.f32 0.0, %v1355
        %v1357 = vpop.f32.mrb[0].mxu0
        %1358 = vmatprep.mubr.f32.mxu0 0.0
        %1359 = vmatmul.mubr.f32.gmra.mrb[0].mxu0 %v1281
        %v1360 = vpop.f32.mrb[0].mxu0
        %v1361 = vadd.f32 0.0, %v1360
        %v1362 = vpop.f32.mrb[0].mxu0
        %1363 = vmatprep.mubr.f32.mxu0 0.0
        %1364 = vmatmul.mubr.f32.gmra.mrb[0].mxu0 %v1284
        %v1365 = vpop.f32.mrb[0].mxu0
        %v1366 = vadd.f32 0.0, %v1365
        %v1367 = vpop.f32.mrb[0].mxu0
        %1368 = vmatprep.mubr.f32.mxu0 0.0
        %1369 = vmatmul.mubr.f32.gmra.mrb[0].mxu0 %v1287
        %v1370 = vpop.f32.mrb[0].mxu0
        %v1371 = vadd.f32 0.0, %v1370
        %v1372 = vpop.f32.mrb[0].mxu0
        %1373 = vdwg.mxu0
        %v1374 = vld [vmem:[%s9] sm:$0xff]
        %v1375 = vld [vmem:[%s9 + $0x8] sm:$0xff]
        %v1377 = vsel %vm693, %v1356, 0
        %v1380 = vsel %vm693, %v1361, 0
        %v1383 = vsel %vm693, %v1366, 0
        %v1386 = vsel %vm693, %v1371, 0
        %1388 = vmatprep.subr.mxu0 0.0
        %1389 = vmatpush1.msra.mxu0 %v1374
        %1390 = vmatprep.subr.mxu0 0.0
        %1391 = vmatpush1.msra.mxu0 %v1375
        %1392 = vmatprep.subr.mxu0 0.0
        %1393 = vmatpush1.msra.mxu0 0.0
        %1394 = vmatprep.subr.mxu0 0.0
        %1395 = vmatpush1.msra.mxu0 0.0
        %1396 = vmatprep.subr.mxu0 0.0
        %1397 = vmatpush1.msra.mxu0 0.0
        %1398 = vmatprep.subr.mxu0 0.0
        %1399 = vmatpush1.msra.mxu0 0.0
        %1400 = vmatprep.subr.mxu0 0.0
        %1401 = vmatpush1.msra.mxu0 0.0
        %1402 = vmatprep.subr.mxu0 0.0
        %1403 = vmatpush1.msra.mxu0 0.0
        %1404 = vmatprep.subr.mxu0 0.0
        %1405 = vmatpush1.msra.mxu0 0.0
        %1406 = vmatprep.subr.mxu0 0.0
        %1407 = vmatpush1.msra.mxu0 0.0
        %1408 = vmatprep.subr.mxu0 0.0
        %1409 = vmatpush1.msra.mxu0 0.0
        %1410 = vmatprep.subr.mxu0 0.0
        %1411 = vmatpush1.msra.mxu0 0.0
        %1412 = vmatprep.subr.mxu0 0.0
        %1413 = vmatpush1.msra.mxu0 0.0
        %1414 = vmatprep.subr.mxu0 0.0
        %1415 = vmatpush1.msra.mxu0 0.0
        %1416 = vmatprep.subr.mxu0 0.0
        %1417 = vmatpush1.msra.mxu0 0.0
        %1418 = vmatprep.subr.mxu0 0.0
        %1419 = vmatpush1.msra.mxu0 0.0
        %1420 = vmatprep.subr.mxu0 0.0
        %1421 = vmatpush1.msra.mxu0 0.0
        %1422 = vmatprep.subr.mxu0 0.0
        %1423 = vmatpush1.msra.mxu0 0.0
        %1424 = vmatprep.subr.mxu0 0.0
        %1425 = vmatpush1.msra.mxu0 0.0
        %1426 = vmatprep.subr.mxu0 0.0
        %1427 = vmatpush1.msra.mxu0 0.0
        %1428 = vmatprep.subr.mxu0 0.0
        %1429 = vmatpush1.msra.mxu0 0.0
        %1430 = vmatprep.subr.mxu0 0.0
        %1431 = vmatpush1.msra.mxu0 0.0
        %1432 = vmatprep.subr.mxu0 0.0
        %1433 = vmatpush1.msra.mxu0 0.0
        %1434 = vmatprep.subr.mxu0 0.0
        %1435 = vmatpush1.msra.mxu0 0.0
        %1436 = vmatprep.subr.mxu0 0.0
        %1437 = vmatpush1.msra.mxu0 0.0
        %1438 = vmatprep.subr.mxu0 0.0
        %1439 = vmatpush1.msra.mxu0 0.0
        %1440 = vmatprep.subr.mxu0 0.0
        %1441 = vmatpush1.msra.mxu0 0.0
        %1442 = vmatprep.subr.mxu0 0.0
        %1443 = vmatpush1.msra.mxu0 0.0
        %1444 = vmatprep.subr.mxu0 0.0
        %1445 = vmatpush1.msra.mxu0 0.0
        %1446 = vmatprep.subr.mxu0 0.0
        %1447 = vmatpush1.msra.mxu0 0.0
        %1448 = vmatprep.subr.mxu0 0.0
        %1449 = vmatpush1.msra.mxu0 0.0
        %1450 = vmatprep.subr.mxu0 0.0
        %1451 = vmatpush1.msra.mxu0 0.0
        %1452 = vmatprep.mubr.f32.mxu0 0.0
        %1453 = vmatmul.mubr.f32.gmra.mrb[0].mxu0 %v1377
        %v1454 = vpop.f32.mrb[0].mxu0
        %v1455 = vadd.f32 0.0, %v1454
        %v1456 = vpop.f32.mrb[0].mxu0
        %1457 = vmatprep.mubr.f32.mxu0 0.0
        %1458 = vmatmul.mubr.f32.gmra.mrb[0].mxu0 %v1380
        %v1459 = vpop.f32.mrb[0].mxu0
        %v1460 = vadd.f32 0.0, %v1459
        %v1461 = vpop.f32.mrb[0].mxu0
        %1462 = vmatprep.mubr.f32.mxu0 0.0
        %1463 = vmatmul.mubr.f32.gmra.mrb[0].mxu0 %v1383
        %v1464 = vpop.f32.mrb[0].mxu0
        %v1465 = vadd.f32 0.0, %v1464
        %v1466 = vpop.f32.mrb[0].mxu0
        %1467 = vmatprep.mubr.f32.mxu0 0.0
        %1468 = vmatmul.mubr.f32.gmra.mrb[0].mxu0 %v1386
        %v1469 = vpop.f32.mrb[0].mxu0
        %v1470 = vadd.f32 0.0, %v1469
        %v1471 = vpop.f32.mrb[0].mxu0
        %1472 = vdwg.mxu0
        %1473 = vst.msk [vmem:[%s594] sm:$0xff] %vm693, %v1455
        %1474 = vst.msk [vmem:[%s594 + $0x8] sm:$0xff] %vm693, %v1460
        %1475 = vst.msk [vmem:[%s594 + $0x10] sm:$0xff] %vm693, %v1465
        %1476 = vst.msk [vmem:[%s594 + $0x18] sm:$0xff] %vm693, %v1470
        %p1477 = scmp.lt.s32.totalorder %s34, 1
        %s1478 = scalar_select %p1477, %s34, 1
        %s1479 = smul.addr %s1478, 4
        %s1480 = smul.addr %s1479, 8
        %s1481 = scalar_lea.vmem %s10, %s1480
        %p1482 = scmp.lt.s32.totalorder %s34, 1
        %s1483 = scalar_select %p1482, %s34, 1
        %s1484 = smul.addr %s1483, 4
        %s1485 = smul.addr %s1484, 8
        %s1486 = scalar_lea.vmem %s11, %s1485
        // Predicated region
        $region93: #{tpu_custom_call.1} parent=59 // pred_check
          %p1487 = pneg %p282
        $region94: #{tpu_custom_call.1} parent=59 // pred_check_branch
          %1489 = sbr.rel (%p1487) target = $region96
        $region95: #{tpu_custom_call.1} parent=59 // pred_region
          _
        $region96: #{tpu_custom_call.1} parent=59 // pred_fallthru
          _
        // Predicated region
        $region97: #{tpu_custom_call.1} parent=59 // pred_check
          %p1490 = pneg %p308
        $region98: #{tpu_custom_call.1} parent=59 // pred_check_branch
          %1492 = sbr.rel (%p1490) target = $region100
        $region99: #{tpu_custom_call.1} parent=59 // pred_region
          _
        $region100: #{tpu_custom_call.1} parent=59 // pred_fallthru
          _
      $region60: #{tpu_custom_call.1} parent=5 // pred_fallthru
        _
      %p1493 = scmp.le.s32.totalorder 2, %s29
      // Predicated region
      $region101: #{tpu_custom_call.1} parent=5 // pred_check
        %p1494 = pneg %p1493
      $region102: #{tpu_custom_call.1} parent=5 // pred_check_branch
        %1496 = sbr.rel (%p1494) target = $region104
      $region103: #{tpu_custom_call.1} parent=5 // pred_region
        %s1497 = ssub.s32 %s29, 2
        // Predicated region
        $region105: #{tpu_custom_call.1} parent=103 // pred_check
          %p1498 = pneg %p288
        $region106: #{tpu_custom_call.1} parent=103 // pred_check_branch
          %1500 = sbr.rel (%p1498) target = $region108
        $region107: #{tpu_custom_call.1} parent=103 // pred_region
          %p1501 = scmp.lt.s32.totalorder %s35, 1
          %s1502 = scalar_select %p1501, %s35, 1
          %s1503 = smul.addr %s1502, 4
          %s1504 = smul.addr %s1503, 8
          %s1505 = scalar_lea.vmem %s10, %s1504
        $region108: #{tpu_custom_call.1} parent=103 // pred_fallthru
          _
        // Predicated region
        $region109: #{tpu_custom_call.1} parent=103 // pred_check
          %p1506 = pneg %p314
        $region110: #{tpu_custom_call.1} parent=103 // pred_check_branch
          %1508 = sbr.rel (%p1506) target = $region112
        $region111: #{tpu_custom_call.1} parent=103 // pred_region
          %p1509 = scmp.lt.s32.totalorder %s35, 1
          %s1510 = scalar_select %p1509, %s35, 1
          %s1511 = smul.addr %s1510, 4
          %s1512 = smul.addr %s1511, 8
          %s1513 = scalar_lea.vmem %s11, %s1512
        $region112: #{tpu_custom_call.1} parent=103 // pred_fallthru
          _
      $region104: #{tpu_custom_call.1} parent=5 // pred_fallthru
        _
    $region6: #{tpu_custom_call.1} parent=1 // loop_footer
      %s33 = sadd.s32 1, %s29
    $region7: #{tpu_custom_call.1} parent=1 // loop_footer_branch
      %28 = sbr.rel target = $region3
    $region8: #{tpu_custom_call.1} parent=1 // loop_exit
      _
    %1514 = vsyncpa [#allocation3], 1
    %s1515 = scalar_lea.sflag [#allocation3], 1
    %1516 = vsyncpa %s1515, 1
    %1517 = vsyncpa [#allocation5], 1
    %s1518 = scalar_lea.sflag [#allocation5], 1
    %1519 = vsyncpa %s1518, 1
    %1520 = vsyncpa [#allocation8], 1
    %s1521 = scalar_lea.sflag [#allocation8], 1
    %1522 = vsyncpa %s1521, 1
    %1523 = vsyncpa [#allocation11], 1
    %1524 = vsyncpa [#allocation14], 1

</llo_original>
